<compile_context>
chip_gen: v7x
topology: tpu7x:2x2x1
jax: 0.10.0
libtpu: 0.0.40
codegen_flags: <defaults>
</compile_context>

<pallas_src>
import functools

import jax
import jax.numpy as jnp
from jax.experimental import pallas as pl
from jax.experimental.pallas import tpu as pltpu


def _round_up(x, m):
    return ((x + m - 1) // m) * m


def _actor_critic_kernel(
    obs_ref,                   # (tb, obs_dim) bf16
    w1_ref, b1_ref,            # fused layer-1: (obs_dim, h_v + h_pi) bf16, (1, h_v + h_pi) f32
    pw2_ref, pb2_ref,          # policy layer-2: (h_pi, h_pi) bf16, (1, h_pi) f32
    vw2_ref, vb2_ref,          # value  layer-2: (h_v, h_v)   bf16, (1, h_v)  f32
    pw3_ref, pb3_ref,          # policy head:    (h_pi, act_dim) bf16, (1, act_dim) f32
    vw3_ref, vb3_ref,          # value  head:    (h_v, 1)        bf16, (1, 1)       f32
    mu_ref,                    # (tb, act_dim) f32 : tanh(policy logits)
    val_ref,                   # (tb, 1)       f32 : state value
    *, h_v,
):
    x = obs_ref[...]  # bf16

    # ---- fused first layer for both heads (shared LHS, one MXU push), f32 accumulate ----
    h = jnp.dot(x, w1_ref[...], preferred_element_type=jnp.float32) + b1_ref[...]
    h = jnp.maximum(h, 0.0)
    hv = h[:, :h_v].astype(jnp.bfloat16)   # value hidden  (lane-aligned slice: starts at 0)
    hp = h[:, h_v:].astype(jnp.bfloat16)   # policy hidden (starts at h_v = 256)

    # ---- second layers ----
    hp = jnp.maximum(
        jnp.dot(hp, pw2_ref[...], preferred_element_type=jnp.float32) + pb2_ref[...],
        0.0).astype(jnp.bfloat16)
    hv = jnp.maximum(
        jnp.dot(hv, vw2_ref[...], preferred_element_type=jnp.float32) + vb2_ref[...],
        0.0).astype(jnp.bfloat16)

    # ---- heads: write exactly the useful columns (no padded slab) ----
    mu_ref[...] = jnp.tanh(
        jnp.dot(hp, pw3_ref[...], preferred_element_type=jnp.float32) + pb3_ref[...])
    val_ref[...] = (
        jnp.dot(hv, vw3_ref[...], preferred_element_type=jnp.float32) + vb3_ref[...])


def prepare_fused_params(params):
    """Fuse / cast parameters ONCE per params update (hoisted out of the forward path)."""
    # Value columns first so the in-kernel split of the fused hidden is 128-lane aligned.
    w1 = jnp.concatenate([params["vw1"], params["pw1"]], axis=1).astype(jnp.bfloat16)
    b1 = jnp.concatenate([params["vb1"], params["pb1"]], axis=1).astype(jnp.float32)
    return {
        "w1": w1, "b1": b1,
        "pw2": params["pw2"].astype(jnp.bfloat16), "pb2": params["pb2"].astype(jnp.float32),
        "vw2": params["vw2"].astype(jnp.bfloat16), "vb2": params["vb2"].astype(jnp.float32),
        "pw3": params["pw3"].astype(jnp.bfloat16), "pb3": params["pb3"].astype(jnp.float32),
        "vw3": params["vw3"].astype(jnp.bfloat16), "vb3": params["vb3"].astype(jnp.float32),
        "log_std": params["log_std"],
        "h_v": int(params["vw2"].shape[0]),
    }


def mlp_actor_critic_forward(obs, fused, batch_tile=1024):
    """Fused policy/value forward. Returns ((pi_mean, pi_log_std), value)."""
    B, obs_dim = obs.shape
    act_dim = fused["pw3"].shape[1]
    h_v = fused["h_v"]

    # Batch tile: large (amortizes ~0.35us per grid step), multiple of 16 (bf16 sublane
    # packing), and capped so the grid keeps >=2 steps when possible, which lets
    # dimension_semantics=("parallel",) split the batch across both v7x TensorCores.
    tb = min(batch_tile, B)
    if B > 16:
        tb = min(tb, _round_up(pl.cdiv(B, 2), 16))
    tb = max(tb, 1)
    grid = (pl.cdiv(B, tb),)

    # bf16 obs at the kernel boundary -> half the obs HBM traffic into the kernel.
    obs_bf = obs.astype(jnp.bfloat16)

    tiled = lambda i: (i, 0)     # batch-tiled operands
    pinned = lambda i: (0, 0)    # weights/biases: same block every step -> stay resident

    in_specs = [
        pl.BlockSpec((tb, obs_dim), tiled),
        pl.BlockSpec(fused["w1"].shape, pinned),
        pl.BlockSpec(fused["b1"].shape, pinned),
        pl.BlockSpec(fused["pw2"].shape, pinned),
        pl.BlockSpec(fused["pb2"].shape, pinned),
        pl.BlockSpec(fused["vw2"].shape, pinned),
        pl.BlockSpec(fused["vb2"].shape, pinned),
        pl.BlockSpec(fused["pw3"].shape, pinned),
        pl.BlockSpec(fused["pb3"].shape, pinned),
        pl.BlockSpec(fused["vw3"].shape, pinned),
        pl.BlockSpec(fused["vb3"].shape, pinned),
    ]
    out_specs = (
        pl.BlockSpec((tb, act_dim), tiled),
        pl.BlockSpec((tb, 1), tiled),
    )
    out_shape = (
        jax.ShapeDtypeStruct((B, act_dim), jnp.float32),
        jax.ShapeDtypeStruct((B, 1), jnp.float32),
    )

    kernel = functools.partial(_actor_critic_kernel, h_v=h_v)

    mu, val = pl.pallas_call(
        kernel,
        out_shape=out_shape,
        grid=grid,
        in_specs=in_specs,
        out_specs=out_specs,
        compiler_params=pltpu.CompilerParams(
            dimension_semantics=("parallel",),       # megacore sharding on v7x
            vmem_limit_bytes=32 * 1024 * 1024,       # fits every generation
        ),
    )(obs_bf,
      fused["w1"], fused["b1"],
      fused["pw2"], fused["pb2"],
      fused["vw2"], fused["vb2"],
      fused["pw3"], fused["pb3"],
      fused["vw3"], fused["vb3"])

    value = val[:, 0]   # trivial (B,1) -> (B,) squeeze (4 B/row; not the padded-slab re-read)
    # IndependentNormalWithFixedVar: distribution params are (mean, fixed log_std).
    return (mu, fused["log_std"]), value


def init_params(key, obs_dim, act_dim, policy_mlp_hidden=64, value_mlp_hidden=256):
    """Deterministic PyTorch-Linear-style init: U(-1/sqrt(fan_in), 1/sqrt(fan_in))."""
    keys = jax.random.split(key, 12)

    def linear(kw, kb, fan_in, fan_out):
        bound = 1.0 / jnp.sqrt(jnp.float32(fan_in))
        w = jax.random.uniform(kw, (fan_in, fan_out), jnp.float32, -bound, bound)
        b = jax.random.uniform(kb, (1, fan_out), jnp.float32, -bound, bound)
        return w, b

    pw1, pb1 = linear(keys[0], keys[1], obs_dim, policy_mlp_hidden)
    pw2, pb2 = linear(keys[2], keys[3], policy_mlp_hidden, policy_mlp_hidden)
    pw3, pb3 = linear(keys[4], keys[5], policy_mlp_hidden, act_dim)
    vw1, vb1 = linear(keys[6], keys[7], obs_dim, value_mlp_hidden)
    vw2, vb2 = linear(keys[8], keys[9], value_mlp_hidden, value_mlp_hidden)
    vw3, vb3 = linear(keys[10], keys[11], value_mlp_hidden, 1)

    return {
        "pw1": pw1, "pb1": pb1, "pw2": pw2, "pb2": pb2, "pw3": pw3, "pb3": pb3,
        "vw1": vw1, "vb1": vb1, "vw2": vw2, "vb2": vb2, "vw3": vw3, "vb3": vb3,
        # fixed-variance parameter of IndependentNormalWithFixedVar, shape (act_dim,)
        "log_std": jnp.zeros((act_dim,), jnp.float32),
    }


if __name__ == "__main__":
    key = jax.random.PRNGKey(0)
    k_obs, k_params = jax.random.split(key)

    batch, obs_dim, act_dim = 256, 16, 8   # tb caps to 128 -> 2 grid steps (exercises tiling)
    obs = jax.random.normal(k_obs, (batch, obs_dim), dtype=jnp.float32)
    params = init_params(k_params, obs_dim, act_dim)

    fused = prepare_fused_params(params)   # hoisted: build once per params update
    jax.block_until_ready(fused)

    (pi_mean, pi_log_std), value = mlp_actor_critic_forward(obs, fused)
    jax.block_until_ready((pi_mean, pi_log_std, value))

    assert pi_mean.shape == (batch, act_dim)
    assert pi_log_std.shape == (act_dim,)
    assert value.shape == (batch,)

    # Pure-JAX f32 reference check (tolerance loosened for the bf16 weight/activation cast).
    def ref(obs, p):
        h = jnp.maximum(obs @ p["pw1"] + p["pb1"], 0.0)
        h = jnp.maximum(h @ p["pw2"] + p["pb2"], 0.0)
        mu = jnp.tanh(h @ p["pw3"] + p["pb3"])
        v = jnp.maximum(obs @ p["vw1"] + p["vb1"], 0.0)
        v = jnp.maximum(v @ p["vw2"] + p["vb2"], 0.0)
        v = (v @ p["vw3"] + p["vb3"]).squeeze(-1)
        return mu, v

    mu_ref, v_ref = ref(obs, params)
    assert jnp.allclose(pi_mean, mu_ref, atol=3e-2), float(jnp.max(jnp.abs(pi_mean - mu_ref)))
    assert jnp.allclose(value, v_ref, atol=3e-2), float(jnp.max(jnp.abs(value - v_ref)))

    print("KERNEL_OK")
</pallas_src>

<mosaic_0001>
module attributes {stable_mosaic.version = 11 : i64} {
  func.func @_actor_critic_kernel(%arg0: i32, %arg1: memref<128x16xbf16, #tpu.memory_space<vmem>>, %arg2: memref<16x320xbf16, #tpu.memory_space<vmem>>, %arg3: memref<1x320xf32, #tpu.memory_space<vmem>>, %arg4: memref<64x64xbf16, #tpu.memory_space<vmem>>, %arg5: memref<1x64xf32, #tpu.memory_space<vmem>>, %arg6: memref<256x256xbf16, #tpu.memory_space<vmem>>, %arg7: memref<1x256xf32, #tpu.memory_space<vmem>>, %arg8: memref<64x8xbf16, #tpu.memory_space<vmem>>, %arg9: memref<1x8xf32, #tpu.memory_space<vmem>>, %arg10: memref<256x1xbf16, #tpu.memory_space<vmem>>, %arg11: memref<1x1xf32, #tpu.memory_space<vmem>>, %arg12: memref<128x8xf32, #tpu.memory_space<vmem>>, %arg13: memref<128x1xf32, #tpu.memory_space<vmem>>) attributes {dimension_semantics = [#tpu.dimension_semantics<parallel>], iteration_bounds = array<i64: 2>, scalar_prefetch = 0 : i64, scratch_operands = 0 : i64, tpu.core_type = #tpu.core_type<tc>, window_params = [{transform_indices = @transform_0, window_bounds = array<i64: 128, 16>}, {pipeline_mode = #tpu.pipeline_mode<synchronous>, transform_indices = @transform_1, window_bounds = array<i64: 16, 320>}, {pipeline_mode = #tpu.pipeline_mode<synchronous>, transform_indices = @transform_2, window_bounds = array<i64: 1, 320>}, {pipeline_mode = #tpu.pipeline_mode<synchronous>, transform_indices = @transform_3, window_bounds = array<i64: 64, 64>}, {pipeline_mode = #tpu.pipeline_mode<synchronous>, transform_indices = @transform_4, window_bounds = array<i64: 1, 64>}, {pipeline_mode = #tpu.pipeline_mode<synchronous>, transform_indices = @transform_5, window_bounds = array<i64: 256, 256>}, {pipeline_mode = #tpu.pipeline_mode<synchronous>, transform_indices = @transform_6, window_bounds = array<i64: 1, 256>}, {pipeline_mode = #tpu.pipeline_mode<synchronous>, transform_indices = @transform_7, window_bounds = array<i64: 64, 8>}, {pipeline_mode = #tpu.pipeline_mode<synchronous>, transform_indices = @transform_8, window_bounds = array<i64: 1, 8>}, {pipeline_mode = #tpu.pipeline_mode<synchronous>, transform_indices = @transform_9, window_bounds = array<i64: 256, 1>}, {pipeline_mode = #tpu.pipeline_mode<synchronous>, transform_indices = @transform_10, window_bounds = array<i64: 1, 1>}, {transform_indices = @transform_11, window_bounds = array<i64: 128, 8>}, {transform_indices = @transform_12, window_bounds = array<i64: 128, 1>}]} {
    %c0 = arith.constant 0 : index
    %c0_0 = arith.constant 0 : index
    %0 = vector.load %arg1[%c0, %c0_0] : memref<128x16xbf16, #tpu.memory_space<vmem>>, vector<128x16xbf16>
    %c0_1 = arith.constant 0 : index
    %c0_2 = arith.constant 0 : index
    %1 = vector.load %arg2[%c0_1, %c0_2] : memref<16x320xbf16, #tpu.memory_space<vmem>>, vector<16x320xbf16>
    %cst = arith.constant dense<0.000000e+00> : vector<128x320xf32>
    %2 = tpu.matmul %0, %1, %cst {dimension_numbers = #tpu.dot_dimension_numbers<[1], [0], [0], [1], [0, 0, 1, 1], [], []>} : vector<128x16xbf16>, vector<16x320xbf16>, vector<128x320xf32> -> vector<128x320xf32>
    %c0_3 = arith.constant 0 : index
    %c0_4 = arith.constant 0 : index
    %3 = vector.load %arg3[%c0_3, %c0_4] : memref<1x320xf32, #tpu.memory_space<vmem>>, vector<1x320xf32>
    %4 = vector.broadcast %3 : vector<1x320xf32> to vector<128x320xf32>
    %5 = arith.addf %2, %4 : vector<128x320xf32>
    %cst_5 = arith.constant 0.000000e+00 : f32
    %6 = vector.broadcast %cst_5 : f32 to vector<128x320xf32>
    %7 = arith.maximumf %5, %6 : vector<128x320xf32>
    %8 = vector.extract_strided_slice %7 {offsets = [0, 0], sizes = [128, 256], strides = [1, 1]} : vector<128x320xf32> to vector<128x256xf32>
    %9 = arith.truncf %8 : vector<128x256xf32> to vector<128x256xbf16>
    %10 = vector.extract_strided_slice %7 {offsets = [0, 256], sizes = [128, 64], strides = [1, 1]} : vector<128x320xf32> to vector<128x64xf32>
    %11 = arith.truncf %10 : vector<128x64xf32> to vector<128x64xbf16>
    %c0_6 = arith.constant 0 : index
    %c0_7 = arith.constant 0 : index
    %12 = vector.load %arg4[%c0_6, %c0_7] : memref<64x64xbf16, #tpu.memory_space<vmem>>, vector<64x64xbf16>
    %cst_8 = arith.constant dense<0.000000e+00> : vector<128x64xf32>
    %13 = tpu.matmul %11, %12, %cst_8 {dimension_numbers = #tpu.dot_dimension_numbers<[1], [0], [0], [1], [0, 0, 1, 1], [], []>} : vector<128x64xbf16>, vector<64x64xbf16>, vector<128x64xf32> -> vector<128x64xf32>
    %c0_9 = arith.constant 0 : index
    %c0_10 = arith.constant 0 : index
    %14 = vector.load %arg5[%c0_9, %c0_10] : memref<1x64xf32, #tpu.memory_space<vmem>>, vector<1x64xf32>
    %15 = vector.broadcast %14 : vector<1x64xf32> to vector<128x64xf32>
    %16 = arith.addf %13, %15 : vector<128x64xf32>
    %cst_11 = arith.constant 0.000000e+00 : f32
    %17 = vector.broadcast %cst_11 : f32 to vector<128x64xf32>
    %18 = arith.maximumf %16, %17 : vector<128x64xf32>
    %19 = arith.truncf %18 : vector<128x64xf32> to vector<128x64xbf16>
    %c0_12 = arith.constant 0 : index
    %c0_13 = arith.constant 0 : index
    %20 = vector.load %arg6[%c0_12, %c0_13] : memref<256x256xbf16, #tpu.memory_space<vmem>>, vector<256x256xbf16>
    %cst_14 = arith.constant dense<0.000000e+00> : vector<128x256xf32>
    %21 = tpu.matmul %9, %20, %cst_14 {dimension_numbers = #tpu.dot_dimension_numbers<[1], [0], [0], [1], [0, 0, 1, 1], [], []>} : vector<128x256xbf16>, vector<256x256xbf16>, vector<128x256xf32> -> vector<128x256xf32>
    %c0_15 = arith.constant 0 : index
    %c0_16 = arith.constant 0 : index
    %22 = vector.load %arg7[%c0_15, %c0_16] : memref<1x256xf32, #tpu.memory_space<vmem>>, vector<1x256xf32>
    %23 = vector.broadcast %22 : vector<1x256xf32> to vector<128x256xf32>
    %24 = arith.addf %21, %23 : vector<128x256xf32>
    %cst_17 = arith.constant 0.000000e+00 : f32
    %25 = vector.broadcast %cst_17 : f32 to vector<128x256xf32>
    %26 = arith.maximumf %24, %25 : vector<128x256xf32>
    %27 = arith.truncf %26 : vector<128x256xf32> to vector<128x256xbf16>
    %c0_18 = arith.constant 0 : index
    %c0_19 = arith.constant 0 : index
    %28 = vector.load %arg8[%c0_18, %c0_19] : memref<64x8xbf16, #tpu.memory_space<vmem>>, vector<64x8xbf16>
    %cst_20 = arith.constant dense<0.000000e+00> : vector<128x8xf32>
    %29 = tpu.matmul %19, %28, %cst_20 {dimension_numbers = #tpu.dot_dimension_numbers<[1], [0], [0], [1], [0, 0, 1, 1], [], []>} : vector<128x64xbf16>, vector<64x8xbf16>, vector<128x8xf32> -> vector<128x8xf32>
    %c0_21 = arith.constant 0 : index
    %c0_22 = arith.constant 0 : index
    %30 = vector.load %arg9[%c0_21, %c0_22] : memref<1x8xf32, #tpu.memory_space<vmem>>, vector<1x8xf32>
    %31 = vector.broadcast %30 : vector<1x8xf32> to vector<128x8xf32>
    %32 = arith.addf %29, %31 : vector<128x8xf32>
    %33 = math.tanh %32 : vector<128x8xf32>
    %c0_23 = arith.constant 0 : index
    %c0_24 = arith.constant 0 : index
    %34 = vector.load %arg12[%c0_23, %c0_24] : memref<128x8xf32, #tpu.memory_space<vmem>>, vector<128x8xf32>
    tpu.vector_store %arg12[%c0_23, %c0_24], %33 {strides = array<i32>} : memref<128x8xf32, #tpu.memory_space<vmem>>, vector<128x8xf32>,
    %c0_25 = arith.constant 0 : index
    %c0_26 = arith.constant 0 : index
    %35 = vector.load %arg10[%c0_25, %c0_26] : memref<256x1xbf16, #tpu.memory_space<vmem>>, vector<256x1xbf16>
    %cst_27 = arith.constant dense<0.000000e+00> : vector<128x1xf32>
    %36 = tpu.matmul %27, %35, %cst_27 {dimension_numbers = #tpu.dot_dimension_numbers<[1], [0], [0], [1], [0, 0, 1, 1], [], []>} : vector<128x256xbf16>, vector<256x1xbf16>, vector<128x1xf32> -> vector<128x1xf32>
    %c0_28 = arith.constant 0 : index
    %c0_29 = arith.constant 0 : index
    %37 = vector.load %arg11[%c0_28, %c0_29] : memref<1x1xf32, #tpu.memory_space<vmem>>, vector<1x1xf32>
    %38 = vector.broadcast %37 : vector<1x1xf32> to vector<128x1xf32>
    %39 = arith.addf %36, %38 : vector<128x1xf32>
    %c0_30 = arith.constant 0 : index
    %c0_31 = arith.constant 0 : index
    %40 = vector.load %arg13[%c0_30, %c0_31] : memref<128x1xf32, #tpu.memory_space<vmem>>, vector<128x1xf32>
    tpu.vector_store %arg13[%c0_30, %c0_31], %39 {strides = array<i32>} : memref<128x1xf32, #tpu.memory_space<vmem>>, vector<128x1xf32>,
    return
  }
  func.func @transform_0(%arg0: i32) -> (i32, i32) {
    %c0_i32 = arith.constant 0 : i32
    %c0_i32_0 = arith.constant 0 : i32
    return %arg0, %c0_i32 : i32, i32
  }
  func.func @transform_1(%arg0: i32) -> (i32, i32) {
    %c0_i32 = arith.constant 0 : i32
    %c0_i32_0 = arith.constant 0 : i32
    %c0_i32_1 = arith.constant 0 : i32
    return %c0_i32, %c0_i32_0 : i32, i32
  }
  func.func @transform_2(%arg0: i32) -> (i32, i32) {
    %c0_i32 = arith.constant 0 : i32
    %c0_i32_0 = arith.constant 0 : i32
    %c0_i32_1 = arith.constant 0 : i32
    return %c0_i32, %c0_i32_0 : i32, i32
  }
  func.func @transform_3(%arg0: i32) -> (i32, i32) {
    %c0_i32 = arith.constant 0 : i32
    %c0_i32_0 = arith.constant 0 : i32
    %c0_i32_1 = arith.constant 0 : i32
    return %c0_i32, %c0_i32_0 : i32, i32
  }
  func.func @transform_4(%arg0: i32) -> (i32, i32) {
    %c0_i32 = arith.constant 0 : i32
    %c0_i32_0 = arith.constant 0 : i32
    %c0_i32_1 = arith.constant 0 : i32
    return %c0_i32, %c0_i32_0 : i32, i32
  }
  func.func @transform_5(%arg0: i32) -> (i32, i32) {
    %c0_i32 = arith.constant 0 : i32
    %c0_i32_0 = arith.constant 0 : i32
    %c0_i32_1 = arith.constant 0 : i32
    return %c0_i32, %c0_i32_0 : i32, i32
  }
  func.func @transform_6(%arg0: i32) -> (i32, i32) {
    %c0_i32 = arith.constant 0 : i32
    %c0_i32_0 = arith.constant 0 : i32
    %c0_i32_1 = arith.constant 0 : i32
    return %c0_i32, %c0_i32_0 : i32, i32
  }
  func.func @transform_7(%arg0: i32) -> (i32, i32) {
    %c0_i32 = arith.constant 0 : i32
    %c0_i32_0 = arith.constant 0 : i32
    %c0_i32_1 = arith.constant 0 : i32
    return %c0_i32, %c0_i32_0 : i32, i32
  }
  func.func @transform_8(%arg0: i32) -> (i32, i32) {
    %c0_i32 = arith.constant 0 : i32
    %c0_i32_0 = arith.constant 0 : i32
    %c0_i32_1 = arith.constant 0 : i32
    return %c0_i32, %c0_i32_0 : i32, i32
  }
  func.func @transform_9(%arg0: i32) -> (i32, i32) {
    %c0_i32 = arith.constant 0 : i32
    %c0_i32_0 = arith.constant 0 : i32
    %c0_i32_1 = arith.constant 0 : i32
    return %c0_i32, %c0_i32_0 : i32, i32
  }
  func.func @transform_10(%arg0: i32) -> (i32, i32) {
    %c0_i32 = arith.constant 0 : i32
    %c0_i32_0 = arith.constant 0 : i32
    %c0_i32_1 = arith.constant 0 : i32
    return %c0_i32, %c0_i32_0 : i32, i32
  }
  func.func @transform_11(%arg0: i32) -> (i32, i32) {
    %c0_i32 = arith.constant 0 : i32
    %c0_i32_0 = arith.constant 0 : i32
    return %arg0, %c0_i32 : i32, i32
  }
  func.func @transform_12(%arg0: i32) -> (i32, i32) {
    %c0_i32 = arith.constant 0 : i32
    %c0_i32_0 = arith.constant 0 : i32
    return %arg0, %c0_i32 : i32, i32
  }
}

</mosaic_0001>

<llo_original>
// kernel: tpu_custom_call.1
$region0: #{tpu_custom_call.1}
  #allocation0 [shape = 'u32[]', space=smem, size = 0x4, offset = 0x4, fixed_abs, tag = 'smem constant byte address 0x4 - core index']
  #allocation1 [shape = 'u32[144,128]{1,0:T(1,128)}', space=vmem, size = 0x12000, scoped, tag = 'internal scratch']
  #allocation2 [shape = 'f32[1,1]{1,0:T(1,128)S(1)}', space=vmem, size = 0x200, scoped, tag = 'scoped memory for tpu_custom_call.1']
  %s0 = inlined_call_operand.vmem [shape: bf16[256,16], index: 0, kind: input, shape index: {}]
  %s1 = inlined_call_operand.vmem [shape: bf16[16,320], index: 1, kind: input, shape index: {}]
  %s2 = inlined_call_operand.vmem [shape: f32[1,320], index: 2, kind: input, shape index: {}]
  %s3 = inlined_call_operand.vmem [shape: bf16[64,64], index: 3, kind: input, shape index: {}]
  %s4 = inlined_call_operand.vmem [shape: f32[1,64], index: 4, kind: input, shape index: {}]
  %s5 = inlined_call_operand.vmem [shape: bf16[256,256], index: 5, kind: input, shape index: {}]
  %s6 = inlined_call_operand.vmem [shape: f32[1,256], index: 6, kind: input, shape index: {}]
  %s7 = inlined_call_operand.vmem [shape: bf16[64,8], index: 7, kind: input, shape index: {}]
  %s8 = inlined_call_operand.vmem [shape: f32[1,8], index: 8, kind: input, shape index: {}]
  %s9 = inlined_call_operand.vmem [shape: bf16[256,1], index: 9, kind: input, shape index: {}]
  %s10 = inlined_call_operand.<no memory space> [shape: f32[1,1], index: 10, kind: input, shape index: {}]
  %s11 = inlined_call_operand.vmem [shape: f32[256,8], index: 11, kind: output, shape index: {0}]
  %s12 = inlined_call_operand.vmem [shape: f32[256,1], index: 12, kind: output, shape index: {1}]
  %13 = xla_tuple %s11, %s12
  %s14 = sld [smem:[#allocation0]]
  $region85: #{tpu_custom_call.1} parent=0
    _
  %s16 = ssub.s32 1, %s14
  %s17 = scalar_select 0, %s16, %s14
  %v18 = vstv %s10
  %19 = vst [vmem:[#allocation2] sm:$0x1] %v18
  loop: start=0, step=1, limit=4
  $region2: #{tpu_custom_call.1} parent=0 // loop_pre_header
    _
  $region3: #{tpu_custom_call.1} parent=0 // loop_header
    %s21 = sphi 0, %s25
    %p22 = scmp.ge.s32.totalorder %s21, 4
    %s31 = sphi 0, %s33
    %s34 = sphi 0, %s31
    %s35 = sphi 0, %s34
    %s51 = sphi 0, %s35
    %s55 = sphi 0, %s55
    %s57 = sphi 0, %s55
    %s58 = sphi 0, %s57
    %s72 = sphi 0, %s58
    %s76 = sphi 0, %s76
    %s78 = sphi 0, %s76
    %s79 = sphi 0, %s78
    %s93 = sphi 0, %s79
    %s97 = sphi 0, %s97
    %s99 = sphi 0, %s97
    %s100 = sphi 0, %s99
    %s114 = sphi 0, %s100
    %s118 = sphi 0, %s118
    %s120 = sphi 0, %s118
    %s121 = sphi 0, %s120
    %s135 = sphi 0, %s121
    %s139 = sphi 0, %s139
    %s141 = sphi 0, %s139
    %s142 = sphi 0, %s141
    %s156 = sphi 0, %s142
    %s160 = sphi 0, %s160
    %s162 = sphi 0, %s160
    %s163 = sphi 0, %s162
    %s177 = sphi 0, %s163
    %s181 = sphi 0, %s181
    %s183 = sphi 0, %s181
    %s184 = sphi 0, %s183
    %s198 = sphi 0, %s184
    %s202 = sphi 0, %s202
    %s204 = sphi 0, %s202
    %s205 = sphi 0, %s204
    %s219 = sphi 0, %s205
    %s223 = sphi 0, %s223
    %s225 = sphi 0, %s223
    %s226 = sphi 0, %s225
    %s240 = sphi 0, %s226
    %s244 = sphi 0, %s244
    %s246 = sphi 0, %s244
    %s247 = sphi 0, %s246
    %s261 = sphi 0, %s247
    %s267 = sphi 0, %s269
    %s270 = sphi 0, %s267
    %s271 = sphi 0, %s270
    %s287 = sphi 0, %s271
    %s293 = sphi 0, %s295
    %s296 = sphi 0, %s293
    %s297 = sphi 0, %s296
    %s313 = sphi 0, %s297
  $region4: #{tpu_custom_call.1} parent=0 // loop_header_branch
    %24 = sbr.rel (%p22) target = $region8
  $region5: #{tpu_custom_call.1} parent=0 // loop_body
    %s26 = ssub.s32 %s21, 1
    %s27 = ssub.s32 %s21, 2
    %s28 = sadd.s32 %s21, 1
    %s29 = ssub.s32 %s21, %s28
    %p30 = scmp.eq.s32.totalorder %s29, 0
    %s32 = sadd.s32 %s31, 1
    %s33 = scalar_select %p30, %s31, %s32
    %p36 = pneg %p30
    %p37 = scmp.eq.s32.totalorder %s21, 1
    %p38 = por %p36, %p37
    %p39 = scmp.ne.s32.totalorder %s31, %s34
    %p40 = scmp.eq.s32.totalorder %s21, 0
    %p41 = por %p39, %p40
    %p42 = scmp.ne.s32.totalorder %s31, %s34
    %p43 = scmp.eq.s32.totalorder %s26, 1
    %p44 = por %p42, %p43
    %p45 = scmp.ne.s32.totalorder %s34, %s35
    %p46 = scmp.eq.s32.totalorder %s26, 0
    %p47 = por %p45, %p46
    %p48 = scmp.ne.s32.totalorder %s34, %s35
    %p49 = scmp.eq.s32.totalorder %s27, 1
    %p50 = por %p48, %p49
    %p52 = scmp.ne.s32.totalorder %s35, %s51
    %p53 = scmp.eq.s32.totalorder %s27, 0
    %p54 = por %p52, %p53
    %s56 = sadd.s32 %s55, 1
    %p59 = scmp.eq.s32.totalorder %s21, 1
    %p60 = scmp.ne.s32.totalorder %s55, %s57
    %p61 = scmp.eq.s32.totalorder %s21, 0
    %p62 = por %p60, %p61
    %p63 = scmp.ne.s32.totalorder %s55, %s57
    %p64 = scmp.eq.s32.totalorder %s26, 1
    %p65 = por %p63, %p64
    %p66 = scmp.ne.s32.totalorder %s57, %s58
    %p67 = scmp.eq.s32.totalorder %s26, 0
    %p68 = por %p66, %p67
    %p69 = scmp.ne.s32.totalorder %s57, %s58
    %p70 = scmp.eq.s32.totalorder %s27, 1
    %p71 = por %p69, %p70
    %p73 = scmp.ne.s32.totalorder %s58, %s72
    %p74 = scmp.eq.s32.totalorder %s27, 0
    %p75 = por %p73, %p74
    %s77 = sadd.s32 %s76, 1
    %p80 = scmp.eq.s32.totalorder %s21, 1
    %p81 = scmp.ne.s32.totalorder %s76, %s78
    %p82 = scmp.eq.s32.totalorder %s21, 0
    %p83 = por %p81, %p82
    %p84 = scmp.ne.s32.totalorder %s76, %s78
    %p85 = scmp.eq.s32.totalorder %s26, 1
    %p86 = por %p84, %p85
    %p87 = scmp.ne.s32.totalorder %s78, %s79
    %p88 = scmp.eq.s32.totalorder %s26, 0
    %p89 = por %p87, %p88
    %p90 = scmp.ne.s32.totalorder %s78, %s79
    %p91 = scmp.eq.s32.totalorder %s27, 1
    %p92 = por %p90, %p91
    %p94 = scmp.ne.s32.totalorder %s79, %s93
    %p95 = scmp.eq.s32.totalorder %s27, 0
    %p96 = por %p94, %p95
    %s98 = sadd.s32 %s97, 1
    %p101 = scmp.eq.s32.totalorder %s21, 1
    %p102 = scmp.ne.s32.totalorder %s97, %s99
    %p103 = scmp.eq.s32.totalorder %s21, 0
    %p104 = por %p102, %p103
    %p105 = scmp.ne.s32.totalorder %s97, %s99
    %p106 = scmp.eq.s32.totalorder %s26, 1
    %p107 = por %p105, %p106
    %p108 = scmp.ne.s32.totalorder %s99, %s100
    %p109 = scmp.eq.s32.totalorder %s26, 0
    %p110 = por %p108, %p109
    %p111 = scmp.ne.s32.totalorder %s99, %s100
    %p112 = scmp.eq.s32.totalorder %s27, 1
    %p113 = por %p111, %p112
    %p115 = scmp.ne.s32.totalorder %s100, %s114
    %p116 = scmp.eq.s32.totalorder %s27, 0
    %p117 = por %p115, %p116
    %s119 = sadd.s32 %s118, 1
    %p122 = scmp.eq.s32.totalorder %s21, 1
    %p123 = scmp.ne.s32.totalorder %s118, %s120
    %p124 = scmp.eq.s32.totalorder %s21, 0
    %p125 = por %p123, %p124
    %p126 = scmp.ne.s32.totalorder %s118, %s120
    %p127 = scmp.eq.s32.totalorder %s26, 1
    %p128 = por %p126, %p127
    %p129 = scmp.ne.s32.totalorder %s120, %s121
    %p130 = scmp.eq.s32.totalorder %s26, 0
    %p131 = por %p129, %p130
    %p132 = scmp.ne.s32.totalorder %s120, %s121
    %p133 = scmp.eq.s32.totalorder %s27, 1
    %p134 = por %p132, %p133
    %p136 = scmp.ne.s32.totalorder %s121, %s135
    %p137 = scmp.eq.s32.totalorder %s27, 0
    %p138 = por %p136, %p137
    %s140 = sadd.s32 %s139, 1
    %p143 = scmp.eq.s32.totalorder %s21, 1
    %p144 = scmp.ne.s32.totalorder %s139, %s141
    %p145 = scmp.eq.s32.totalorder %s21, 0
    %p146 = por %p144, %p145
    %p147 = scmp.ne.s32.totalorder %s139, %s141
    %p148 = scmp.eq.s32.totalorder %s26, 1
    %p149 = por %p147, %p148
    %p150 = scmp.ne.s32.totalorder %s141, %s142
    %p151 = scmp.eq.s32.totalorder %s26, 0
    %p152 = por %p150, %p151
    %p153 = scmp.ne.s32.totalorder %s141, %s142
    %p154 = scmp.eq.s32.totalorder %s27, 1
    %p155 = por %p153, %p154
    %p157 = scmp.ne.s32.totalorder %s142, %s156
    %p158 = scmp.eq.s32.totalorder %s27, 0
    %p159 = por %p157, %p158
    %s161 = sadd.s32 %s160, 1
    %p164 = scmp.eq.s32.totalorder %s21, 1
    %p165 = scmp.ne.s32.totalorder %s160, %s162
    %p166 = scmp.eq.s32.totalorder %s21, 0
    %p167 = por %p165, %p166
    %p168 = scmp.ne.s32.totalorder %s160, %s162
    %p169 = scmp.eq.s32.totalorder %s26, 1
    %p170 = por %p168, %p169
    %p171 = scmp.ne.s32.totalorder %s162, %s163
    %p172 = scmp.eq.s32.totalorder %s26, 0
    %p173 = por %p171, %p172
    %p174 = scmp.ne.s32.totalorder %s162, %s163
    %p175 = scmp.eq.s32.totalorder %s27, 1
    %p176 = por %p174, %p175
    %p178 = scmp.ne.s32.totalorder %s163, %s177
    %p179 = scmp.eq.s32.totalorder %s27, 0
    %p180 = por %p178, %p179
    %s182 = sadd.s32 %s181, 1
    %p185 = scmp.eq.s32.totalorder %s21, 1
    %p186 = scmp.ne.s32.totalorder %s181, %s183
    %p187 = scmp.eq.s32.totalorder %s21, 0
    %p188 = por %p186, %p187
    %p189 = scmp.ne.s32.totalorder %s181, %s183
    %p190 = scmp.eq.s32.totalorder %s26, 1
    %p191 = por %p189, %p190
    %p192 = scmp.ne.s32.totalorder %s183, %s184
    %p193 = scmp.eq.s32.totalorder %s26, 0
    %p194 = por %p192, %p193
    %p195 = scmp.ne.s32.totalorder %s183, %s184
    %p196 = scmp.eq.s32.totalorder %s27, 1
    %p197 = por %p195, %p196
    %p199 = scmp.ne.s32.totalorder %s184, %s198
    %p200 = scmp.eq.s32.totalorder %s27, 0
    %p201 = por %p199, %p200
    %s203 = sadd.s32 %s202, 1
    %p206 = scmp.eq.s32.totalorder %s21, 1
    %p207 = scmp.ne.s32.totalorder %s202, %s204
    %p208 = scmp.eq.s32.totalorder %s21, 0
    %p209 = por %p207, %p208
    %p210 = scmp.ne.s32.totalorder %s202, %s204
    %p211 = scmp.eq.s32.totalorder %s26, 1
    %p212 = por %p210, %p211
    %p213 = scmp.ne.s32.totalorder %s204, %s205
    %p214 = scmp.eq.s32.totalorder %s26, 0
    %p215 = por %p213, %p214
    %p216 = scmp.ne.s32.totalorder %s204, %s205
    %p217 = scmp.eq.s32.totalorder %s27, 1
    %p218 = por %p216, %p217
    %p220 = scmp.ne.s32.totalorder %s205, %s219
    %p221 = scmp.eq.s32.totalorder %s27, 0
    %p222 = por %p220, %p221
    %s224 = sadd.s32 %s223, 1
    %p227 = scmp.eq.s32.totalorder %s21, 1
    %p228 = scmp.ne.s32.totalorder %s223, %s225
    %p229 = scmp.eq.s32.totalorder %s21, 0
    %p230 = por %p228, %p229
    %p231 = scmp.ne.s32.totalorder %s223, %s225
    %p232 = scmp.eq.s32.totalorder %s26, 1
    %p233 = por %p231, %p232
    %p234 = scmp.ne.s32.totalorder %s225, %s226
    %p235 = scmp.eq.s32.totalorder %s26, 0
    %p236 = por %p234, %p235
    %p237 = scmp.ne.s32.totalorder %s225, %s226
    %p238 = scmp.eq.s32.totalorder %s27, 1
    %p239 = por %p237, %p238
    %p241 = scmp.ne.s32.totalorder %s226, %s240
    %p242 = scmp.eq.s32.totalorder %s27, 0
    %p243 = por %p241, %p242
    %s245 = sadd.s32 %s244, 1
    %p248 = scmp.eq.s32.totalorder %s21, 1
    %p249 = scmp.ne.s32.totalorder %s244, %s246
    %p250 = scmp.eq.s32.totalorder %s21, 0
    %p251 = por %p249, %p250
    %p252 = scmp.ne.s32.totalorder %s244, %s246
    %p253 = scmp.eq.s32.totalorder %s26, 1
    %p254 = por %p252, %p253
    %p255 = scmp.ne.s32.totalorder %s246, %s247
    %p256 = scmp.eq.s32.totalorder %s26, 0
    %p257 = por %p255, %p256
    %p258 = scmp.ne.s32.totalorder %s246, %s247
    %p259 = scmp.eq.s32.totalorder %s27, 1
    %p260 = por %p258, %p259
    %p262 = scmp.ne.s32.totalorder %s247, %s261
    %p263 = scmp.eq.s32.totalorder %s27, 0
    %p264 = por %p262, %p263
    %s265 = ssub.s32 %s21, %s28
    %p266 = scmp.eq.s32.totalorder %s265, 0
    %s268 = sadd.s32 %s267, 1
    %s269 = scalar_select %p266, %s267, %s268
    %p272 = pneg %p266
    %p273 = scmp.eq.s32.totalorder %s21, 1
    %p274 = por %p272, %p273
    %p275 = scmp.ne.s32.totalorder %s267, %s270
    %p276 = scmp.eq.s32.totalorder %s21, 0
    %p277 = por %p275, %p276
    %p278 = scmp.ne.s32.totalorder %s267, %s270
    %p279 = scmp.eq.s32.totalorder %s26, 1
    %p280 = por %p278, %p279
    %p281 = scmp.ne.s32.totalorder %s270, %s271
    %p282 = scmp.eq.s32.totalorder %s26, 0
    %p283 = por %p281, %p282
    %p284 = scmp.ne.s32.totalorder %s270, %s271
    %p285 = scmp.eq.s32.totalorder %s27, 1
    %p286 = por %p284, %p285
    %p288 = scmp.ne.s32.totalorder %s271, %s287
    %p289 = scmp.eq.s32.totalorder %s27, 0
    %p290 = por %p288, %p289
    %s291 = ssub.s32 %s21, %s28
    %p292 = scmp.eq.s32.totalorder %s291, 0
    %s294 = sadd.s32 %s293, 1
    %s295 = scalar_select %p292, %s293, %s294
    %p298 = pneg %p292
    %p299 = scmp.eq.s32.totalorder %s21, 1
    %p300 = por %p298, %p299
    %p301 = scmp.ne.s32.totalorder %s293, %s296
    %p302 = scmp.eq.s32.totalorder %s21, 0
    %p303 = por %p301, %p302
    %p304 = scmp.ne.s32.totalorder %s293, %s296
    %p305 = scmp.eq.s32.totalorder %s26, 1
    %p306 = por %p304, %p305
    %p307 = scmp.ne.s32.totalorder %s296, %s297
    %p308 = scmp.eq.s32.totalorder %s26, 0
    %p309 = por %p307, %p308
    %p310 = scmp.ne.s32.totalorder %s296, %s297
    %p311 = scmp.eq.s32.totalorder %s27, 1
    %p312 = por %p310, %p311
    %p314 = scmp.ne.s32.totalorder %s297, %s313
    %p315 = scmp.eq.s32.totalorder %s27, 0
    %p316 = por %p314, %p315
    %p317 = scmp.le.s32.totalorder 1, %s21
    %p318 = scmp.lt.s32.totalorder %s21, 3
    %p319 = pnand %p317, %p318
    %p320 = pneg %p319
    // Predicated region
    $region9: #{tpu_custom_call.1} parent=5 // pred_check
      _
    $region10: #{tpu_custom_call.1} parent=5 // pred_check_branch
      %322 = sbr.rel (%p319) target = $region12
    $region11: #{tpu_custom_call.1} parent=5 // pred_region
      %s323 = ssub.s32 %s21, 1
      // Predicated region
      $region13: #{tpu_custom_call.1} parent=11 // pred_check
        %p324 = pneg %p68
      $region14: #{tpu_custom_call.1} parent=11 // pred_check_branch
        %326 = sbr.rel (%p324) target = $region16
      $region15: #{tpu_custom_call.1} parent=11 // pred_region
        _
      $region16: #{tpu_custom_call.1} parent=11 // pred_fallthru
        _
      // Predicated region
      $region17: #{tpu_custom_call.1} parent=11 // pred_check
        %p327 = pneg %p89
      $region18: #{tpu_custom_call.1} parent=11 // pred_check_branch
        %329 = sbr.rel (%p327) target = $region20
      $region19: #{tpu_custom_call.1} parent=11 // pred_region
        _
      $region20: #{tpu_custom_call.1} parent=11 // pred_fallthru
        _
      // Predicated region
      $region21: #{tpu_custom_call.1} parent=11 // pred_check
        %p330 = pneg %p110
      $region22: #{tpu_custom_call.1} parent=11 // pred_check_branch
        %332 = sbr.rel (%p330) target = $region24
      $region23: #{tpu_custom_call.1} parent=11 // pred_region
        _
      $region24: #{tpu_custom_call.1} parent=11 // pred_fallthru
        _
      // Predicated region
      $region25: #{tpu_custom_call.1} parent=11 // pred_check
        %p333 = pneg %p131
      $region26: #{tpu_custom_call.1} parent=11 // pred_check_branch
        %335 = sbr.rel (%p333) target = $region28
      $region27: #{tpu_custom_call.1} parent=11 // pred_region
        _
      $region28: #{tpu_custom_call.1} parent=11 // pred_fallthru
        _
      // Predicated region
      $region29: #{tpu_custom_call.1} parent=11 // pred_check
        %p336 = pneg %p152
      $region30: #{tpu_custom_call.1} parent=11 // pred_check_branch
        %338 = sbr.rel (%p336) target = $region32
      $region31: #{tpu_custom_call.1} parent=11 // pred_region
        _
      $region32: #{tpu_custom_call.1} parent=11 // pred_fallthru
        _
      // Predicated region
      $region33: #{tpu_custom_call.1} parent=11 // pred_check
        %p339 = pneg %p173
      $region34: #{tpu_custom_call.1} parent=11 // pred_check_branch
        %341 = sbr.rel (%p339) target = $region36
      $region35: #{tpu_custom_call.1} parent=11 // pred_region
        _
      $region36: #{tpu_custom_call.1} parent=11 // pred_fallthru
        _
      // Predicated region
      $region37: #{tpu_custom_call.1} parent=11 // pred_check
        %p342 = pneg %p194
      $region38: #{tpu_custom_call.1} parent=11 // pred_check_branch
        %344 = sbr.rel (%p342) target = $region40
      $region39: #{tpu_custom_call.1} parent=11 // pred_region
        _
      $region40: #{tpu_custom_call.1} parent=11 // pred_fallthru
        _
      // Predicated region
      $region41: #{tpu_custom_call.1} parent=11 // pred_check
        %p345 = pneg %p215
      $region42: #{tpu_custom_call.1} parent=11 // pred_check_branch
        %347 = sbr.rel (%p345) target = $region44
      $region43: #{tpu_custom_call.1} parent=11 // pred_region
        _
      $region44: #{tpu_custom_call.1} parent=11 // pred_fallthru
        _
      // Predicated region
      $region45: #{tpu_custom_call.1} parent=11 // pred_check
        %p348 = pneg %p236
      $region46: #{tpu_custom_call.1} parent=11 // pred_check_branch
        %350 = sbr.rel (%p348) target = $region48
      $region47: #{tpu_custom_call.1} parent=11 // pred_region
        _
      $region48: #{tpu_custom_call.1} parent=11 // pred_fallthru
        _
      // Predicated region
      $region49: #{tpu_custom_call.1} parent=11 // pred_check
        %p351 = pneg %p257
      $region50: #{tpu_custom_call.1} parent=11 // pred_check_branch
        %353 = sbr.rel (%p351) target = $region52
      $region51: #{tpu_custom_call.1} parent=11 // pred_region
        _
      $region52: #{tpu_custom_call.1} parent=11 // pred_fallthru
        _
    $region12: #{tpu_custom_call.1} parent=5 // pred_fallthru
      _
    %p354 = scmp.lt.s32.totalorder %s21, 2
    // Predicated region
    $region53: #{tpu_custom_call.1} parent=5 // pred_check
      %p355 = pneg %p354
    $region54: #{tpu_custom_call.1} parent=5 // pred_check_branch
      %357 = sbr.rel (%p355) target = $region56
    $region55: #{tpu_custom_call.1} parent=5 // pred_region
      // Predicated region
      $region57: #{tpu_custom_call.1} parent=55 // pred_check
        %p358 = pneg %p41
      $region58: #{tpu_custom_call.1} parent=55 // pred_check_branch
        %360 = sbr.rel (%p358) target = $region60
      $region59: #{tpu_custom_call.1} parent=55 // pred_region
        %s361 = smul.u32 16, %s21
        %p362 = scmp.lt.s32.totalorder %s361, 31
        %s363 = scalar_select %p362, %s361, 31
        %s364 = smul.addr %s363, 4
        %s365 = scalar_lea.vmem %s0, %s364
        %s366 = smul.u32 16, %s21
      $region60: #{tpu_custom_call.1} parent=55 // pred_fallthru
        _
    $region56: #{tpu_custom_call.1} parent=5 // pred_fallthru
      _
    %p367 = scmp.le.s32.totalorder 1, %s21
    %p368 = scmp.lt.s32.totalorder %s21, 3
    %p369 = pnand %p367, %p368
    %p370 = pneg %p369
    // Predicated region
    $region61: #{tpu_custom_call.1} parent=5 // pred_check
      _
    $region62: #{tpu_custom_call.1} parent=5 // pred_check_branch
      %372 = sbr.rel (%p369) target = $region64
    $region63: #{tpu_custom_call.1} parent=5 // pred_region
      %s373 = ssub.s32 %s21, 1
      %s374 = smul.u32 16, %s26
      %p375 = scmp.lt.s32.totalorder %s374, 31
      %s376 = scalar_select %p375, %s374, 31
      %s377 = smul.addr %s376, 4
      %s378 = scalar_lea.vmem %s0, %s377
      %p379 = pneg %p47
      %p380 = pneg %p44
      %p381 = pneg %p68
      %p382 = pneg %p65
      %p383 = pneg %p89
      %p384 = pneg %p86
      %p385 = pneg %p110
      %p386 = pneg %p107
      %p387 = pneg %p131
      %p388 = pneg %p128
      %p389 = pneg %p152
      %p390 = pneg %p149
      %p391 = pneg %p173
      %p392 = pneg %p170
      %p393 = pneg %p194
      %p394 = pneg %p191
      %p395 = pneg %p215
      %p396 = pneg %p212
      %p397 = pneg %p236
      %p398 = pneg %p233
      %p399 = pneg %p257
      %p400 = pneg %p254
      %p401 = pneg %p283
      %p402 = pneg %p280
      %s403 = smul.u32 16, %s26
      %p404 = scmp.lt.s32.totalorder %s403, 31
      %s405 = scalar_select %p404, %s403, 31
      %s406 = smul.addr %s405, 8
      %s407 = scalar_lea.vmem %s11, %s406
      %p408 = pneg %p309
      %p409 = pneg %p306
      %s410 = smul.u32 16, %s26
      %p411 = scmp.lt.s32.totalorder %s410, 31
      %s412 = scalar_select %p411, %s410, 31
      %s413 = smul.addr %s412, 8
      %s414 = scalar_lea.vmem %s12, %s413
      %s415 = smul.u32 16, %s26
      %p416 = scmp.lt.s32.totalorder %s415, 31
      %s417 = scalar_select %p416, %s415, 31
      %s418 = smul.addr %s417, 4
      %s419 = scalar_lea.vmem %s0, %s418
      %s420 = smul.u32 16, %s26
      %s421 = smul.u32 16, %s26
      %p422 = scmp.lt.s32.totalorder %s421, 31
      %s423 = scalar_select %p422, %s421, 31
      %s424 = smul.addr %s423, 8
      %s425 = scalar_lea.vmem %s11, %s424
      %s426 = smul.u32 16, %s26
      %s427 = smul.u32 16, %s26
      %p428 = scmp.lt.s32.totalorder %s427, 31
      %s429 = scalar_select %p428, %s427, 31
      %s430 = smul.addr %s429, 8
      %s431 = scalar_lea.vmem %s12, %s430
      %s432 = smul.u32 16, %s26
      %v434 = vld [vmem:[%s419] sm:$0xf]
      %v435 = vld [vmem:[%s419 + $0x4] sm:$0xf]
      %v436 = vld [vmem:[%s419 + $0x8] sm:$0xf]
      %v437 = vld [vmem:[%s419 + $0xc] sm:$0xf]
      %v438 = vld [vmem:[%s419 + $0x10] sm:$0xf]
      %v439 = vld [vmem:[%s419 + $0x14] sm:$0xf]
      %v440 = vld [vmem:[%s419 + $0x18] sm:$0xf]
      %v441 = vld [vmem:[%s419 + $0x1c] sm:$0xf]
      %v442 = vld [vmem:[%s419 + $0x20] sm:$0xf]
      %v443 = vld [vmem:[%s419 + $0x24] sm:$0xf]
      %v444 = vld [vmem:[%s419 + $0x28] sm:$0xf]
      %v445 = vld [vmem:[%s419 + $0x2c] sm:$0xf]
      %v446 = vld [vmem:[%s419 + $0x30] sm:$0xf]
      %v447 = vld [vmem:[%s419 + $0x34] sm:$0xf]
      %v448 = vld [vmem:[%s419 + $0x38] sm:$0xf]
      %v449 = vld [vmem:[%s419 + $0x3c] sm:$0xf]
      %v450 = vld [vmem:[%s1] sm:$0xff]
      %v451 = vld [vmem:[%s1 + $0x8] sm:$0xf]
      %v452 = vld [vmem:[%s1 + $0xc] sm:$0xff]
      %v453 = vld [vmem:[%s1 + $0x14] sm:$0xf]
      %v454 = vld [vmem:[%s2] sm:$0x7]
      %v456 = vlaneseq
      %v457 = vshrl.u32 %v456, 7
      %v458 = vsub.s32 0, %v457
      %v459 = vrot.slane %v454, %v458
      %v460 = vlaneseq
      %v461 = vshrl.u32 %v460, 7
      %v462 = vsub.s32 1, %v461
      %v463 = vrot.slane %v454, %v462
      %v464 = vlaneseq
      %v465 = vshrl.u32 %v464, 7
      %v466 = vsub.s32 2, %v465
      %v467 = vrot.slane %v454, %v466
      %v487 = vunpack.c.l.b16 %v434
      %v488 = vunpack.c.l.b16 %v435
      %v489 = vunpack.c.l.b16 %v436
      %v490 = vunpack.c.l.b16 %v437
      %v491 = vunpack.c.l.b16 %v438
      %v492 = vunpack.c.l.b16 %v439
      %v493 = vunpack.c.l.b16 %v440
      %v494 = vunpack.c.l.b16 %v441
      %v495 = vunpack.c.l.b16 %v442
      %v496 = vunpack.c.l.b16 %v443
      %v497 = vunpack.c.l.b16 %v444
      %v498 = vunpack.c.l.b16 %v445
      %v499 = vunpack.c.l.b16 %v446
      %v500 = vunpack.c.l.b16 %v447
      %v501 = vunpack.c.l.b16 %v448
      %v502 = vunpack.c.l.b16 %v449
      %v503 = vpack.c.b16 %v488, %v487
      %v504 = vpack.c.b16 %v490, %v489
      %v505 = vpack.c.b16 %v492, %v491
      %v506 = vpack.c.b16 %v494, %v493
      %v507 = vpack.c.b16 %v496, %v495
      %v508 = vpack.c.b16 %v498, %v497
      %v509 = vpack.c.b16 %v500, %v499
      %v510 = vpack.c.b16 %v502, %v501
      %v515 = vunpack.c.l.b16 %v450
      %v516 = vunpack.c.h.b16 %v450
      %v517 = vunpack.c.l.b16 %v451
      %v518 = vunpack.c.l.b16 %v452
      %v519 = vunpack.c.h.b16 %v452
      %v520 = vunpack.c.l.b16 %v453
      %v521 = vpack.c.b16 %v518, %v515
      %v522 = vpack.c.b16 %v519, %v516
      %v523 = vpack.c.b16 %v520, %v517
      %vm527 = vcmask 130048
      %v529 = vsel %vm527, %v503, 0
      %v532 = vsel %vm527, %v504, 0
      %v535 = vsel %vm527, %v505, 0
      %v538 = vsel %vm527, %v506, 0
      %v541 = vsel %vm527, %v507, 0
      %v544 = vsel %vm527, %v508, 0
      %v547 = vsel %vm527, %v509, 0
      %v550 = vsel %vm527, %v510, 0
      %552 = vmatprep.subr.bf16.mxu0 %v522
      %553 = vmatpush1.bf16.msra.mxu0 %v521
      %554 = vmatprep.subr.bf16.mxu0 0
      %555 = vmatpush1.bf16.msra.mxu0 0
      %556 = vmatprep.subr.bf16.mxu0 0
      %557 = vmatpush1.bf16.msra.mxu0 0
      %558 = vmatprep.subr.bf16.mxu0 0
      %559 = vmatpush1.bf16.msra.mxu0 0
      %560 = vmatprep.subr.bf16.mxu0 0
      %561 = vmatpush1.bf16.msra.mxu0 0
      %562 = vmatprep.subr.bf16.mxu0 0
      %563 = vmatpush1.bf16.msra.mxu0 0
      %564 = vmatprep.subr.bf16.mxu0 0
      %565 = vmatpush1.bf16.msra.mxu0 0
      %566 = vmatprep.subr.bf16.mxu0 0
      %567 = vmatpush1.bf16.msra.mxu0 0
      %568 = vmatprep.subr.bf16.mxu0 0
      %569 = vmatpush1.bf16.msra.mxu0 0
      %570 = vmatprep.subr.bf16.mxu0 0
      %571 = vmatpush1.bf16.msra.mxu0 0
      %572 = vmatprep.subr.bf16.mxu0 0
      %573 = vmatpush1.bf16.msra.mxu0 0
      %574 = vmatprep.subr.bf16.mxu0 0
      %575 = vmatpush1.bf16.msra.mxu0 0
      %576 = vmatprep.subr.bf16.mxu0 0
      %577 = vmatpush1.bf16.msra.mxu0 0
      %578 = vmatprep.subr.bf16.mxu0 0
      %579 = vmatpush1.bf16.msra.mxu0 0
      %580 = vmatprep.subr.bf16.mxu0 0
      %581 = vmatpush1.bf16.msra.mxu0 0
      %582 = vmatprep.subr.bf16.mxu0 0
      %583 = vmatpush1.bf16.msra.mxu0 0
      %584 = vmatprep.mubr.bf16.mxu0 0
      %585 = vmatmul.mubr.bf16.gmra.mrb[0].mxu0 %v529
      %v586 = vpop.f32.mrb[0].mxu0
      %v587 = vadd.f32 %v459, %v586
      %v588 = vpop.f32.mrb[0].mxu0
      %v589 = vadd.f32 %v463, %v588
      %v590 = vpop.f32.mrb[0].mxu0
      %v591 = vadd.f32 %v459, %v590
      %v592 = vpop.f32.mrb[0].mxu0
      %v593 = vadd.f32 %v463, %v592
      %594 = vmatprep.mubr.bf16.mxu0 0
      %595 = vmatmul.mubr.bf16.gmra.mrb[0].mxu0 %v532
      %v596 = vpop.f32.mrb[0].mxu0
      %v597 = vadd.f32 %v459, %v596
      %v598 = vpop.f32.mrb[0].mxu0
      %v599 = vadd.f32 %v463, %v598
      %v600 = vpop.f32.mrb[0].mxu0
      %v601 = vadd.f32 %v459, %v600
      %v602 = vpop.f32.mrb[0].mxu0
      %v603 = vadd.f32 %v463, %v602
      %604 = vmatprep.mubr.bf16.mxu0 0
      %605 = vmatmul.mubr.bf16.gmra.mrb[0].mxu0 %v535
      %v606 = vpop.f32.mrb[0].mxu0
      %v607 = vadd.f32 %v459, %v606
      %v608 = vpop.f32.mrb[0].mxu0
      %v609 = vadd.f32 %v463, %v608
      %v610 = vpop.f32.mrb[0].mxu0
      %v611 = vadd.f32 %v459, %v610
      %v612 = vpop.f32.mrb[0].mxu0
      %v613 = vadd.f32 %v463, %v612
      %614 = vmatprep.mubr.bf16.mxu0 0
      %615 = vmatmul.mubr.bf16.gmra.mrb[0].mxu0 %v538
      %v616 = vpop.f32.mrb[0].mxu0
      %v617 = vadd.f32 %v459, %v616
      %v618 = vpop.f32.mrb[0].mxu0
      %v619 = vadd.f32 %v463, %v618
      %v620 = vpop.f32.mrb[0].mxu0
      %v621 = vadd.f32 %v459, %v620
      %v622 = vpop.f32.mrb[0].mxu0
      %v623 = vadd.f32 %v463, %v622
      %624 = vmatprep.mubr.bf16.mxu0 0
      %625 = vmatmul.mubr.bf16.gmra.mrb[0].mxu0 %v541
      %v626 = vpop.f32.mrb[0].mxu0
      %v627 = vadd.f32 %v459, %v626
      %v628 = vpop.f32.mrb[0].mxu0
      %v629 = vadd.f32 %v463, %v628
      %v630 = vpop.f32.mrb[0].mxu0
      %v631 = vadd.f32 %v459, %v630
      %v632 = vpop.f32.mrb[0].mxu0
      %v633 = vadd.f32 %v463, %v632
      %634 = vmatprep.mubr.bf16.mxu0 0
      %635 = vmatmul.mubr.bf16.gmra.mrb[0].mxu0 %v544
      %v636 = vpop.f32.mrb[0].mxu0
      %v637 = vadd.f32 %v459, %v636
      %v638 = vpop.f32.mrb[0].mxu0
      %v639 = vadd.f32 %v463, %v638
      %v640 = vpop.f32.mrb[0].mxu0
      %v641 = vadd.f32 %v459, %v640
      %v642 = vpop.f32.mrb[0].mxu0
      %v643 = vadd.f32 %v463, %v642
      %644 = vmatprep.mubr.bf16.mxu0 0
      %645 = vmatmul.mubr.bf16.gmra.mrb[0].mxu0 %v547
      %v646 = vpop.f32.mrb[0].mxu0
      %v647 = vadd.f32 %v459, %v646
      %v648 = vpop.f32.mrb[0].mxu0
      %v649 = vadd.f32 %v463, %v648
      %v650 = vpop.f32.mrb[0].mxu0
      %v651 = vadd.f32 %v459, %v650
      %v652 = vpop.f32.mrb[0].mxu0
      %v653 = vadd.f32 %v463, %v652
      %654 = vmatprep.mubr.bf16.mxu0 0
      %655 = vmatmul.mubr.bf16.gmra.mrb[0].mxu0 %v550
      %v656 = vpop.f32.mrb[0].mxu0
      %v657 = vadd.f32 %v459, %v656
      %v658 = vpop.f32.mrb[0].mxu0
      %v659 = vadd.f32 %v463, %v658
      %v660 = vpop.f32.mrb[0].mxu0
      %v661 = vadd.f32 %v459, %v660
      %v662 = vpop.f32.mrb[0].mxu0
      %v663 = vadd.f32 %v463, %v662
      %664 = vdwg.mxu0
      %665 = vmatprep.subr.bf16.mxu0 0
      %666 = vmatpush1.bf16.msra.mxu0 %v523
      %667 = vmatprep.subr.bf16.mxu0 0
      %668 = vmatpush1.bf16.msra.mxu0 0
      %669 = vmatprep.subr.bf16.mxu0 0
      %670 = vmatpush1.bf16.msra.mxu0 0
      %671 = vmatprep.subr.bf16.mxu0 0
      %672 = vmatpush1.bf16.msra.mxu0 0
      %673 = vmatprep.subr.bf16.mxu0 0
      %674 = vmatpush1.bf16.msra.mxu0 0
      %675 = vmatprep.subr.bf16.mxu0 0
      %676 = vmatpush1.bf16.msra.mxu0 0
      %677 = vmatprep.subr.bf16.mxu0 0
      %678 = vmatpush1.bf16.msra.mxu0 0
      %679 = vmatprep.subr.bf16.mxu0 0
      %680 = vmatpush1.bf16.msra.mxu0 0
      %681 = vmatprep.subr.bf16.mxu0 0
      %682 = vmatpush1.bf16.msra.mxu0 0
      %683 = vmatprep.subr.bf16.mxu0 0
      %684 = vmatpush1.bf16.msra.mxu0 0
      %685 = vmatprep.subr.bf16.mxu0 0
      %686 = vmatpush1.bf16.msra.mxu0 0
      %687 = vmatprep.subr.bf16.mxu0 0
      %688 = vmatpush1.bf16.msra.mxu0 0
      %689 = vmatprep.subr.bf16.mxu0 0
      %690 = vmatpush1.bf16.msra.mxu0 0
      %691 = vmatprep.subr.bf16.mxu0 0
      %692 = vmatpush1.bf16.msra.mxu0 0
      %693 = vmatprep.subr.bf16.mxu0 0
      %694 = vmatpush1.bf16.msra.mxu0 0
      %695 = vmatprep.subr.bf16.mxu0 0
      %696 = vmatpush1.bf16.msra.mxu0 0
      %697 = vmatprep.mubr.bf16.mxu0 0
      %698 = vmatmul.mubr.bf16.gmra.mrb[0].mxu0 %v529
      %v699 = vpop.f32.mrb[0].mxu0
      %v700 = vadd.f32 %v467, %v699
      %v701 = vpop.f32.mrb[0].mxu0
      %v702 = vpop.f32.mrb[0].mxu0
      %v703 = vadd.f32 %v467, %v702
      %v704 = vpop.f32.mrb[0].mxu0
      %705 = vmatprep.mubr.bf16.mxu0 0
      %706 = vmatmul.mubr.bf16.gmra.mrb[0].mxu0 %v532
      %v707 = vpop.f32.mrb[0].mxu0
      %v708 = vadd.f32 %v467, %v707
      %v709 = vpop.f32.mrb[0].mxu0
      %v710 = vpop.f32.mrb[0].mxu0
      %v711 = vadd.f32 %v467, %v710
      %v712 = vpop.f32.mrb[0].mxu0
      %713 = vmatprep.mubr.bf16.mxu0 0
      %714 = vmatmul.mubr.bf16.gmra.mrb[0].mxu0 %v535
      %v715 = vpop.f32.mrb[0].mxu0
      %v716 = vadd.f32 %v467, %v715
      %v717 = vpop.f32.mrb[0].mxu0
      %v718 = vpop.f32.mrb[0].mxu0
      %v719 = vadd.f32 %v467, %v718
      %v720 = vpop.f32.mrb[0].mxu0
      %721 = vmatprep.mubr.bf16.mxu0 0
      %722 = vmatmul.mubr.bf16.gmra.mrb[0].mxu0 %v538
      %v723 = vpop.f32.mrb[0].mxu0
      %v724 = vadd.f32 %v467, %v723
      %v725 = vpop.f32.mrb[0].mxu0
      %v726 = vpop.f32.mrb[0].mxu0
      %v727 = vadd.f32 %v467, %v726
      %v728 = vpop.f32.mrb[0].mxu0
      %729 = vmatprep.mubr.bf16.mxu0 0
      %730 = vmatmul.mubr.bf16.gmra.mrb[0].mxu0 %v541
      %v731 = vpop.f32.mrb[0].mxu0
      %v732 = vadd.f32 %v467, %v731
      %v733 = vpop.f32.mrb[0].mxu0
      %v734 = vpop.f32.mrb[0].mxu0
      %v735 = vadd.f32 %v467, %v734
      %v736 = vpop.f32.mrb[0].mxu0
      %737 = vmatprep.mubr.bf16.mxu0 0
      %738 = vmatmul.mubr.bf16.gmra.mrb[0].mxu0 %v544
      %v739 = vpop.f32.mrb[0].mxu0
      %v740 = vadd.f32 %v467, %v739
      %v741 = vpop.f32.mrb[0].mxu0
      %v742 = vpop.f32.mrb[0].mxu0
      %v743 = vadd.f32 %v467, %v742
      %v744 = vpop.f32.mrb[0].mxu0
      %745 = vmatprep.mubr.bf16.mxu0 0
      %746 = vmatmul.mubr.bf16.gmra.mrb[0].mxu0 %v547
      %v747 = vpop.f32.mrb[0].mxu0
      %v748 = vadd.f32 %v467, %v747
      %v749 = vpop.f32.mrb[0].mxu0
      %v750 = vpop.f32.mrb[0].mxu0
      %v751 = vadd.f32 %v467, %v750
      %v752 = vpop.f32.mrb[0].mxu0
      %753 = vmatprep.mubr.bf16.mxu0 0
      %754 = vmatmul.mubr.bf16.gmra.mrb[0].mxu0 %v550
      %v755 = vpop.f32.mrb[0].mxu0
      %v756 = vadd.f32 %v467, %v755
      %v757 = vpop.f32.mrb[0].mxu0
      %v758 = vpop.f32.mrb[0].mxu0
      %v759 = vadd.f32 %v467, %v758
      %v760 = vpop.f32.mrb[0].mxu0
      %761 = vdwg.mxu0
      %v762 = vmax.f32 %v587, 0.0
      %v763 = vmax.f32 %v589, 0.0
      %v764 = vmax.f32 %v700, 0.0
      %v765 = vmax.f32 %v591, 0.0
      %v766 = vmax.f32 %v593, 0.0
      %v767 = vmax.f32 %v703, 0.0
      %v768 = vmax.f32 %v597, 0.0
      %v769 = vmax.f32 %v599, 0.0
      %v770 = vmax.f32 %v708, 0.0
      %v771 = vmax.f32 %v601, 0.0
      %v772 = vmax.f32 %v603, 0.0
      %v773 = vmax.f32 %v711, 0.0
      %v774 = vmax.f32 %v607, 0.0
      %v775 = vmax.f32 %v609, 0.0
      %v776 = vmax.f32 %v716, 0.0
      %v777 = vmax.f32 %v611, 0.0
      %v778 = vmax.f32 %v613, 0.0
      %v779 = vmax.f32 %v719, 0.0
      %v780 = vmax.f32 %v617, 0.0
      %v781 = vmax.f32 %v619, 0.0
      %v782 = vmax.f32 %v724, 0.0
      %v783 = vmax.f32 %v621, 0.0
      %v784 = vmax.f32 %v623, 0.0
      %v785 = vmax.f32 %v727, 0.0
      %v786 = vmax.f32 %v627, 0.0
      %v787 = vmax.f32 %v629, 0.0
      %v788 = vmax.f32 %v732, 0.0
      %v789 = vmax.f32 %v631, 0.0
      %v790 = vmax.f32 %v633, 0.0
      %v791 = vmax.f32 %v735, 0.0
      %v792 = vmax.f32 %v637, 0.0
      %v793 = vmax.f32 %v639, 0.0
      %v794 = vmax.f32 %v740, 0.0
      %v795 = vmax.f32 %v641, 0.0
      %v796 = vmax.f32 %v643, 0.0
      %v797 = vmax.f32 %v743, 0.0
      %v798 = vmax.f32 %v647, 0.0
      %v799 = vmax.f32 %v649, 0.0
      %v800 = vmax.f32 %v748, 0.0
      %v801 = vmax.f32 %v651, 0.0
      %v802 = vmax.f32 %v653, 0.0
      %v803 = vmax.f32 %v751, 0.0
      %v804 = vmax.f32 %v657, 0.0
      %v805 = vmax.f32 %v659, 0.0
      %v806 = vmax.f32 %v756, 0.0
      %v807 = vmax.f32 %v661, 0.0
      %v808 = vmax.f32 %v663, 0.0
      %v809 = vmax.f32 %v759, 0.0
      %v810 = vpack.c.bf16 %v765, %v762
      %v811 = vpack.c.bf16 %v766, %v763
      %v812 = vpack.c.bf16 %v771, %v768
      %v813 = vpack.c.bf16 %v772, %v769
      %v814 = vpack.c.bf16 %v777, %v774
      %v815 = vpack.c.bf16 %v778, %v775
      %v816 = vpack.c.bf16 %v783, %v780
      %v817 = vpack.c.bf16 %v784, %v781
      %v818 = vpack.c.bf16 %v789, %v786
      %v819 = vpack.c.bf16 %v790, %v787
      %v820 = vpack.c.bf16 %v795, %v792
      %v821 = vpack.c.bf16 %v796, %v793
      %v822 = vpack.c.bf16 %v801, %v798
      %v823 = vpack.c.bf16 %v802, %v799
      %v824 = vpack.c.bf16 %v807, %v804
      %v825 = vpack.c.bf16 %v808, %v805
      %v826 = vpack.c.bf16 %v767, %v764
      %v827 = vpack.c.bf16 %v773, %v770
      %v828 = vpack.c.bf16 %v779, %v776
      %v829 = vpack.c.bf16 %v785, %v782
      %v830 = vpack.c.bf16 %v791, %v788
      %v831 = vpack.c.bf16 %v797, %v794
      %v832 = vpack.c.bf16 %v803, %v800
      %v833 = vpack.c.bf16 %v809, %v806
      %v834 = vld [vmem:[%s3] sm:$0xf]
      %v835 = vld [vmem:[%s3 + $0x4] sm:$0xf]
      %v836 = vld [vmem:[%s3 + $0x8] sm:$0xf]
      %v837 = vld [vmem:[%s3 + $0xc] sm:$0xf]
      %v838 = vld [vmem:[%s3 + $0x10] sm:$0xf]
      %v839 = vld [vmem:[%s3 + $0x14] sm:$0xf]
      %v840 = vld [vmem:[%s3 + $0x18] sm:$0xf]
      %v841 = vld [vmem:[%s3 + $0x1c] sm:$0xf]
      %v842 = vld [vmem:[%s4] sm:$0x1]
      %v844 = vlaneseq
      %v845 = vshrl.u32 %v844, 7
      %v846 = vsub.s32 0, %v845
      %v847 = vrot.slane %v842, %v846
      %v857 = vunpack.c.l.b16 %v834
      %v858 = vunpack.c.l.b16 %v835
      %v859 = vunpack.c.l.b16 %v836
      %v860 = vunpack.c.l.b16 %v837
      %v861 = vunpack.c.l.b16 %v838
      %v862 = vunpack.c.l.b16 %v839
      %v863 = vunpack.c.l.b16 %v840
      %v864 = vunpack.c.l.b16 %v841
      %v865 = vpack.c.b16 %v858, %v857
      %v866 = vpack.c.b16 %v860, %v859
      %v867 = vpack.c.b16 %v862, %v861
      %v868 = vpack.c.b16 %v864, %v863
      %vm873 = vcmask 523264
      %v875 = vsel %vm873, %v826, 0
      %v878 = vsel %vm873, %v827, 0
      %v881 = vsel %vm873, %v828, 0
      %v884 = vsel %vm873, %v829, 0
      %v887 = vsel %vm873, %v830, 0
      %v890 = vsel %vm873, %v831, 0
      %v893 = vsel %vm873, %v832, 0
      %v896 = vsel %vm873, %v833, 0
      %898 = vmatprep.subr.bf16.mxu0 0
      %899 = vmatpush1.bf16.msra.mxu0 %v865
      %900 = vmatprep.subr.bf16.mxu0 0
      %901 = vmatpush1.bf16.msra.mxu0 %v866
      %902 = vmatprep.subr.bf16.mxu0 0
      %903 = vmatpush1.bf16.msra.mxu0 %v867
      %904 = vmatprep.subr.bf16.mxu0 0
      %905 = vmatpush1.bf16.msra.mxu0 %v868
      %906 = vmatprep.subr.bf16.mxu0 0
      %907 = vmatpush1.bf16.msra.mxu0 0
      %908 = vmatprep.subr.bf16.mxu0 0
      %909 = vmatpush1.bf16.msra.mxu0 0
      %910 = vmatprep.subr.bf16.mxu0 0
      %911 = vmatpush1.bf16.msra.mxu0 0
      %912 = vmatprep.subr.bf16.mxu0 0
      %913 = vmatpush1.bf16.msra.mxu0 0
      %914 = vmatprep.subr.bf16.mxu0 0
      %915 = vmatpush1.bf16.msra.mxu0 0
      %916 = vmatprep.subr.bf16.mxu0 0
      %917 = vmatpush1.bf16.msra.mxu0 0
      %918 = vmatprep.subr.bf16.mxu0 0
      %919 = vmatpush1.bf16.msra.mxu0 0
      %920 = vmatprep.subr.bf16.mxu0 0
      %921 = vmatpush1.bf16.msra.mxu0 0
      %922 = vmatprep.subr.bf16.mxu0 0
      %923 = vmatpush1.bf16.msra.mxu0 0
      %924 = vmatprep.subr.bf16.mxu0 0
      %925 = vmatpush1.bf16.msra.mxu0 0
      %926 = vmatprep.subr.bf16.mxu0 0
      %927 = vmatpush1.bf16.msra.mxu0 0
      %928 = vmatprep.subr.bf16.mxu0 0
      %929 = vmatpush1.bf16.msra.mxu0 0
      %930 = vmatprep.mubr.bf16.mxu0 0
      %931 = vmatmul.mubr.bf16.gmra.mrb[0].mxu0 %v875
      %v932 = vpop.f32.mrb[0].mxu0
      %v933 = vadd.f32 %v847, %v932
      %v934 = vpop.f32.mrb[0].mxu0
      %v935 = vpop.f32.mrb[0].mxu0
      %v936 = vadd.f32 %v847, %v935
      %v937 = vpop.f32.mrb[0].mxu0
      %938 = vmatprep.mubr.bf16.mxu0 0
      %939 = vmatmul.mubr.bf16.gmra.mrb[0].mxu0 %v878
      %v940 = vpop.f32.mrb[0].mxu0
      %v941 = vadd.f32 %v847, %v940
      %v942 = vpop.f32.mrb[0].mxu0
      %v943 = vpop.f32.mrb[0].mxu0
      %v944 = vadd.f32 %v847, %v943
      %v945 = vpop.f32.mrb[0].mxu0
      %946 = vmatprep.mubr.bf16.mxu0 0
      %947 = vmatmul.mubr.bf16.gmra.mrb[0].mxu0 %v881
      %v948 = vpop.f32.mrb[0].mxu0
      %v949 = vadd.f32 %v847, %v948
      %v950 = vpop.f32.mrb[0].mxu0
      %v951 = vpop.f32.mrb[0].mxu0
      %v952 = vadd.f32 %v847, %v951
      %v953 = vpop.f32.mrb[0].mxu0
      %954 = vmatprep.mubr.bf16.mxu0 0
      %955 = vmatmul.mubr.bf16.gmra.mrb[0].mxu0 %v884
      %v956 = vpop.f32.mrb[0].mxu0
      %v957 = vadd.f32 %v847, %v956
      %v958 = vpop.f32.mrb[0].mxu0
      %v959 = vpop.f32.mrb[0].mxu0
      %v960 = vadd.f32 %v847, %v959
      %v961 = vpop.f32.mrb[0].mxu0
      %962 = vmatprep.mubr.bf16.mxu0 0
      %963 = vmatmul.mubr.bf16.gmra.mrb[0].mxu0 %v887
      %v964 = vpop.f32.mrb[0].mxu0
      %v965 = vadd.f32 %v847, %v964
      %v966 = vpop.f32.mrb[0].mxu0
      %v967 = vpop.f32.mrb[0].mxu0
      %v968 = vadd.f32 %v847, %v967
      %v969 = vpop.f32.mrb[0].mxu0
      %970 = vmatprep.mubr.bf16.mxu0 0
      %971 = vmatmul.mubr.bf16.gmra.mrb[0].mxu0 %v890
      %v972 = vpop.f32.mrb[0].mxu0
      %v973 = vadd.f32 %v847, %v972
      %v974 = vpop.f32.mrb[0].mxu0
      %v975 = vpop.f32.mrb[0].mxu0
      %v976 = vadd.f32 %v847, %v975
      %v977 = vpop.f32.mrb[0].mxu0
      %978 = vmatprep.mubr.bf16.mxu0 0
      %979 = vmatmul.mubr.bf16.gmra.mrb[0].mxu0 %v893
      %v980 = vpop.f32.mrb[0].mxu0
      %v981 = vadd.f32 %v847, %v980
      %v982 = vpop.f32.mrb[0].mxu0
      %v983 = vpop.f32.mrb[0].mxu0
      %v984 = vadd.f32 %v847, %v983
      %v985 = vpop.f32.mrb[0].mxu0
      %986 = vmatprep.mubr.bf16.mxu0 0
      %987 = vmatmul.mubr.bf16.gmra.mrb[0].mxu0 %v896
      %v988 = vpop.f32.mrb[0].mxu0
      %v989 = vadd.f32 %v847, %v988
      %v990 = vpop.f32.mrb[0].mxu0
      %v991 = vpop.f32.mrb[0].mxu0
      %v992 = vadd.f32 %v847, %v991
      %v993 = vpop.f32.mrb[0].mxu0
      %994 = vdwg.mxu0
      %v995 = vmax.f32 %v933, 0.0
      %v996 = vmax.f32 %v936, 0.0
      %v997 = vmax.f32 %v941, 0.0
      %v998 = vmax.f32 %v944, 0.0
      %v999 = vmax.f32 %v949, 0.0
      %v1000 = vmax.f32 %v952, 0.0
      %v1001 = vmax.f32 %v957, 0.0
      %v1002 = vmax.f32 %v960, 0.0
      %v1003 = vmax.f32 %v965, 0.0
      %v1004 = vmax.f32 %v968, 0.0
      %v1005 = vmax.f32 %v973, 0.0
      %v1006 = vmax.f32 %v976, 0.0
      %v1007 = vmax.f32 %v981, 0.0
      %v1008 = vmax.f32 %v984, 0.0
      %v1009 = vmax.f32 %v989, 0.0
      %v1010 = vmax.f32 %v992, 0.0
      %v1011 = vpack.c.bf16 %v996, %v995
      %v1012 = vpack.c.bf16 %v998, %v997
      %v1013 = vpack.c.bf16 %v1000, %v999
      %v1014 = vpack.c.bf16 %v1002, %v1001
      %v1015 = vpack.c.bf16 %v1004, %v1003
      %v1016 = vpack.c.bf16 %v1006, %v1005
      %v1017 = vpack.c.bf16 %v1008, %v1007
      %v1018 = vpack.c.bf16 %v1010, %v1009
      %v1019 = vld [vmem:[%s5] sm:$0xff]
      %v1020 = vld [vmem:[%s5 + $0x8] sm:$0xff]
      %v1021 = vld [vmem:[%s5 + $0x10] sm:$0xff]
      %v1022 = vld [vmem:[%s5 + $0x18] sm:$0xff]
      %v1023 = vld [vmem:[%s5 + $0x20] sm:$0xff]
      %v1024 = vld [vmem:[%s5 + $0x28] sm:$0xff]
      %v1025 = vld [vmem:[%s5 + $0x30] sm:$0xff]
      %v1026 = vld [vmem:[%s5 + $0x38] sm:$0xff]
      %v1027 = vld [vmem:[%s5 + $0x40] sm:$0xff]
      %v1028 = vld [vmem:[%s5 + $0x48] sm:$0xff]
      %v1029 = vld [vmem:[%s5 + $0x50] sm:$0xff]
      %v1030 = vld [vmem:[%s5 + $0x58] sm:$0xff]
      %v1031 = vld [vmem:[%s5 + $0x60] sm:$0xff]
      %v1032 = vld [vmem:[%s5 + $0x68] sm:$0xff]
      %v1033 = vld [vmem:[%s5 + $0x70] sm:$0xff]
      %v1034 = vld [vmem:[%s5 + $0x78] sm:$0xff]
      %v1035 = vld [vmem:[%s5 + $0x80] sm:$0xff]
      %v1036 = vld [vmem:[%s5 + $0x88] sm:$0xff]
      %v1037 = vld [vmem:[%s5 + $0x90] sm:$0xff]
      %v1038 = vld [vmem:[%s5 + $0x98] sm:$0xff]
      %v1039 = vld [vmem:[%s5 + $0xa0] sm:$0xff]
      %v1040 = vld [vmem:[%s5 + $0xa8] sm:$0xff]
      %v1041 = vld [vmem:[%s5 + $0xb0] sm:$0xff]
      %v1042 = vld [vmem:[%s5 + $0xb8] sm:$0xff]
      %v1043 = vld [vmem:[%s5 + $0xc0] sm:$0xff]
      %v1044 = vld [vmem:[%s5 + $0xc8] sm:$0xff]
      %v1045 = vld [vmem:[%s5 + $0xd0] sm:$0xff]
      %v1046 = vld [vmem:[%s5 + $0xd8] sm:$0xff]
      %v1047 = vld [vmem:[%s5 + $0xe0] sm:$0xff]
      %v1048 = vld [vmem:[%s5 + $0xe8] sm:$0xff]
      %v1049 = vld [vmem:[%s5 + $0xf0] sm:$0xff]
      %v1050 = vld [vmem:[%s5 + $0xf8] sm:$0xff]
      %v1051 = vld [vmem:[%s6] sm:$0x3]
      %v1053 = vlaneseq
      %v1054 = vshrl.u32 %v1053, 7
      %v1055 = vsub.s32 0, %v1054
      %v1056 = vrot.slane %v1051, %v1055
      %v1057 = vlaneseq
      %v1058 = vshrl.u32 %v1057, 7
      %v1059 = vsub.s32 1, %v1058
      %v1060 = vrot.slane %v1051, %v1059
      %v1095 = vunpack.c.l.b16 %v1019
      %v1096 = vunpack.c.h.b16 %v1019
      %v1097 = vunpack.c.l.b16 %v1020
      %v1098 = vunpack.c.h.b16 %v1020
      %v1099 = vunpack.c.l.b16 %v1021
      %v1100 = vunpack.c.h.b16 %v1021
      %v1101 = vunpack.c.l.b16 %v1022
      %v1102 = vunpack.c.h.b16 %v1022
      %v1103 = vunpack.c.l.b16 %v1023
      %v1104 = vunpack.c.h.b16 %v1023
      %v1105 = vunpack.c.l.b16 %v1024
      %v1106 = vunpack.c.h.b16 %v1024
      %v1107 = vunpack.c.l.b16 %v1025
      %v1108 = vunpack.c.h.b16 %v1025
      %v1109 = vunpack.c.l.b16 %v1026
      %v1110 = vunpack.c.h.b16 %v1026
      %v1111 = vunpack.c.l.b16 %v1027
      %v1112 = vunpack.c.h.b16 %v1027
      %v1113 = vunpack.c.l.b16 %v1028
      %v1114 = vunpack.c.h.b16 %v1028
      %v1115 = vunpack.c.l.b16 %v1029
      %v1116 = vunpack.c.h.b16 %v1029
      %v1117 = vunpack.c.l.b16 %v1030
      %v1118 = vunpack.c.h.b16 %v1030
      %v1119 = vunpack.c.l.b16 %v1031
      %v1120 = vunpack.c.h.b16 %v1031
      %v1121 = vunpack.c.l.b16 %v1032
      %v1122 = vunpack.c.h.b16 %v1032
      %v1123 = vunpack.c.l.b16 %v1033
      %v1124 = vunpack.c.h.b16 %v1033
      %v1125 = vunpack.c.l.b16 %v1034
      %v1126 = vunpack.c.h.b16 %v1034
      %v1127 = vunpack.c.l.b16 %v1035
      %v1128 = vunpack.c.h.b16 %v1035
      %v1129 = vunpack.c.l.b16 %v1036
      %v1130 = vunpack.c.h.b16 %v1036
      %v1131 = vunpack.c.l.b16 %v1037
      %v1132 = vunpack.c.h.b16 %v1037
      %v1133 = vunpack.c.l.b16 %v1038
      %v1134 = vunpack.c.h.b16 %v1038
      %v1135 = vunpack.c.l.b16 %v1039
      %v1136 = vunpack.c.h.b16 %v1039
      %v1137 = vunpack.c.l.b16 %v1040
      %v1138 = vunpack.c.h.b16 %v1040
      %v1139 = vunpack.c.l.b16 %v1041
      %v1140 = vunpack.c.h.b16 %v1041
      %v1141 = vunpack.c.l.b16 %v1042
      %v1142 = vunpack.c.h.b16 %v1042
      %v1143 = vunpack.c.l.b16 %v1043
      %v1144 = vunpack.c.h.b16 %v1043
      %v1145 = vunpack.c.l.b16 %v1044
      %v1146 = vunpack.c.h.b16 %v1044
      %v1147 = vunpack.c.l.b16 %v1045
      %v1148 = vunpack.c.h.b16 %v1045
      %v1149 = vunpack.c.l.b16 %v1046
      %v1150 = vunpack.c.h.b16 %v1046
      %v1151 = vunpack.c.l.b16 %v1047
      %v1152 = vunpack.c.h.b16 %v1047
      %v1153 = vunpack.c.l.b16 %v1048
      %v1154 = vunpack.c.h.b16 %v1048
      %v1155 = vunpack.c.l.b16 %v1049
      %v1156 = vunpack.c.h.b16 %v1049
      %v1157 = vunpack.c.l.b16 %v1050
      %v1158 = vunpack.c.h.b16 %v1050
      %v1159 = vpack.c.b16 %v1097, %v1095
      %v1160 = vpack.c.b16 %v1098, %v1096
      %v1161 = vpack.c.b16 %v1101, %v1099
      %v1162 = vpack.c.b16 %v1102, %v1100
      %v1163 = vpack.c.b16 %v1105, %v1103
      %v1164 = vpack.c.b16 %v1106, %v1104
      %v1165 = vpack.c.b16 %v1109, %v1107
      %v1166 = vpack.c.b16 %v1110, %v1108
      %v1167 = vpack.c.b16 %v1113, %v1111
      %v1168 = vpack.c.b16 %v1114, %v1112
      %v1169 = vpack.c.b16 %v1117, %v1115
      %v1170 = vpack.c.b16 %v1118, %v1116
      %v1171 = vpack.c.b16 %v1121, %v1119
      %v1172 = vpack.c.b16 %v1122, %v1120
      %v1173 = vpack.c.b16 %v1125, %v1123
      %v1174 = vpack.c.b16 %v1126, %v1124
      %v1175 = vpack.c.b16 %v1129, %v1127
      %v1176 = vpack.c.b16 %v1130, %v1128
      %v1177 = vpack.c.b16 %v1133, %v1131
      %v1178 = vpack.c.b16 %v1134, %v1132
      %v1179 = vpack.c.b16 %v1137, %v1135
      %v1180 = vpack.c.b16 %v1138, %v1136
      %v1181 = vpack.c.b16 %v1141, %v1139
      %v1182 = vpack.c.b16 %v1142, %v1140
      %v1183 = vpack.c.b16 %v1145, %v1143
      %v1184 = vpack.c.b16 %v1146, %v1144
      %v1185 = vpack.c.b16 %v1149, %v1147
      %v1186 = vpack.c.b16 %v1150, %v1148
      %v1187 = vpack.c.b16 %v1153, %v1151
      %v1188 = vpack.c.b16 %v1154, %v1152
      %v1189 = vpack.c.b16 %v1157, %v1155
      %v1190 = vpack.c.b16 %v1158, %v1156
      %1223 = vmatprep.subr.bf16.mxu0 %v1160
      %1224 = vmatpush1.bf16.msra.mxu0 %v1159
      %1225 = vmatprep.subr.bf16.mxu0 %v1162
      %1226 = vmatpush1.bf16.msra.mxu0 %v1161
      %1227 = vmatprep.subr.bf16.mxu0 %v1164
      %1228 = vmatpush1.bf16.msra.mxu0 %v1163
      %1229 = vmatprep.subr.bf16.mxu0 %v1166
      %1230 = vmatpush1.bf16.msra.mxu0 %v1165
      %1231 = vmatprep.subr.bf16.mxu0 %v1168
      %1232 = vmatpush1.bf16.msra.mxu0 %v1167
      %1233 = vmatprep.subr.bf16.mxu0 %v1170
      %1234 = vmatpush1.bf16.msra.mxu0 %v1169
      %1235 = vmatprep.subr.bf16.mxu0 %v1172
      %1236 = vmatpush1.bf16.msra.mxu0 %v1171
      %1237 = vmatprep.subr.bf16.mxu0 %v1174
      %1238 = vmatpush1.bf16.msra.mxu0 %v1173
      %1239 = vmatprep.subr.bf16.mxu0 %v1176
      %1240 = vmatpush1.bf16.msra.mxu0 %v1175
      %1241 = vmatprep.subr.bf16.mxu0 %v1178
      %1242 = vmatpush1.bf16.msra.mxu0 %v1177
      %1243 = vmatprep.subr.bf16.mxu0 %v1180
      %1244 = vmatpush1.bf16.msra.mxu0 %v1179
      %1245 = vmatprep.subr.bf16.mxu0 %v1182
      %1246 = vmatpush1.bf16.msra.mxu0 %v1181
      %1247 = vmatprep.subr.bf16.mxu0 %v1184
      %1248 = vmatpush1.bf16.msra.mxu0 %v1183
      %1249 = vmatprep.subr.bf16.mxu0 %v1186
      %1250 = vmatpush1.bf16.msra.mxu0 %v1185
      %1251 = vmatprep.subr.bf16.mxu0 %v1188
      %1252 = vmatpush1.bf16.msra.mxu0 %v1187
      %1253 = vmatprep.subr.bf16.mxu0 %v1190
      %1254 = vmatpush1.bf16.msra.mxu0 %v1189
      %1255 = vmatprep.mubr.bf16.mxu0 %v811
      %1256 = vmatmul.mubr.bf16.gmra.mrb[0].mxu0 %v810
      %v1257 = vpop.f32.mrb[0].mxu0
      %v1258 = vadd.f32 %v1056, %v1257
      %v1259 = vpop.f32.mrb[0].mxu0
      %v1260 = vadd.f32 %v1060, %v1259
      %v1261 = vpop.f32.mrb[0].mxu0
      %v1262 = vadd.f32 %v1056, %v1261
      %v1263 = vpop.f32.mrb[0].mxu0
      %v1264 = vadd.f32 %v1060, %v1263
      %1265 = vmatprep.mubr.bf16.mxu0 %v813
      %1266 = vmatmul.mubr.bf16.gmra.mrb[0].mxu0 %v812
      %v1267 = vpop.f32.mrb[0].mxu0
      %v1268 = vadd.f32 %v1056, %v1267
      %v1269 = vpop.f32.mrb[0].mxu0
      %v1270 = vadd.f32 %v1060, %v1269
      %v1271 = vpop.f32.mrb[0].mxu0
      %v1272 = vadd.f32 %v1056, %v1271
      %v1273 = vpop.f32.mrb[0].mxu0
      %v1274 = vadd.f32 %v1060, %v1273
      %1275 = vmatprep.mubr.bf16.mxu0 %v815
      %1276 = vmatmul.mubr.bf16.gmra.mrb[0].mxu0 %v814
      %v1277 = vpop.f32.mrb[0].mxu0
      %v1278 = vadd.f32 %v1056, %v1277
      %v1279 = vpop.f32.mrb[0].mxu0
      %v1280 = vadd.f32 %v1060, %v1279
      %v1281 = vpop.f32.mrb[0].mxu0
      %v1282 = vadd.f32 %v1056, %v1281
      %v1283 = vpop.f32.mrb[0].mxu0
      %v1284 = vadd.f32 %v1060, %v1283
      %1285 = vmatprep.mubr.bf16.mxu0 %v817
      %1286 = vmatmul.mubr.bf16.gmra.mrb[0].mxu0 %v816
      %v1287 = vpop.f32.mrb[0].mxu0
      %v1288 = vadd.f32 %v1056, %v1287
      %v1289 = vpop.f32.mrb[0].mxu0
      %v1290 = vadd.f32 %v1060, %v1289
      %v1291 = vpop.f32.mrb[0].mxu0
      %v1292 = vadd.f32 %v1056, %v1291
      %v1293 = vpop.f32.mrb[0].mxu0
      %v1294 = vadd.f32 %v1060, %v1293
      %1295 = vmatprep.mubr.bf16.mxu0 %v819
      %1296 = vmatmul.mubr.bf16.gmra.mrb[0].mxu0 %v818
      %v1297 = vpop.f32.mrb[0].mxu0
      %v1298 = vadd.f32 %v1056, %v1297
      %v1299 = vpop.f32.mrb[0].mxu0
      %v1300 = vadd.f32 %v1060, %v1299
      %v1301 = vpop.f32.mrb[0].mxu0
      %v1302 = vadd.f32 %v1056, %v1301
      %v1303 = vpop.f32.mrb[0].mxu0
      %v1304 = vadd.f32 %v1060, %v1303
      %1305 = vmatprep.mubr.bf16.mxu0 %v821
      %1306 = vmatmul.mubr.bf16.gmra.mrb[0].mxu0 %v820
      %v1307 = vpop.f32.mrb[0].mxu0
      %v1308 = vadd.f32 %v1056, %v1307
      %v1309 = vpop.f32.mrb[0].mxu0
      %v1310 = vadd.f32 %v1060, %v1309
      %v1311 = vpop.f32.mrb[0].mxu0
      %v1312 = vadd.f32 %v1056, %v1311
      %v1313 = vpop.f32.mrb[0].mxu0
      %v1314 = vadd.f32 %v1060, %v1313
      %1315 = vmatprep.mubr.bf16.mxu0 %v823
      %1316 = vmatmul.mubr.bf16.gmra.mrb[0].mxu0 %v822
      %v1317 = vpop.f32.mrb[0].mxu0
      %v1318 = vadd.f32 %v1056, %v1317
      %v1319 = vpop.f32.mrb[0].mxu0
      %v1320 = vadd.f32 %v1060, %v1319
      %v1321 = vpop.f32.mrb[0].mxu0
      %v1322 = vadd.f32 %v1056, %v1321
      %v1323 = vpop.f32.mrb[0].mxu0
      %v1324 = vadd.f32 %v1060, %v1323
      %1325 = vmatprep.mubr.bf16.mxu0 %v825
      %1326 = vmatmul.mubr.bf16.gmra.mrb[0].mxu0 %v824
      %v1327 = vpop.f32.mrb[0].mxu0
      %v1328 = vadd.f32 %v1056, %v1327
      %v1329 = vpop.f32.mrb[0].mxu0
      %v1330 = vadd.f32 %v1060, %v1329
      %v1331 = vpop.f32.mrb[0].mxu0
      %v1332 = vadd.f32 %v1056, %v1331
      %v1333 = vpop.f32.mrb[0].mxu0
      %v1334 = vadd.f32 %v1060, %v1333
      %1335 = vdwg.mxu0
      %v1336 = vmax.f32 %v1258, 0.0
      %v1337 = vmax.f32 %v1260, 0.0
      %v1338 = vmax.f32 %v1262, 0.0
      %v1339 = vmax.f32 %v1264, 0.0
      %v1340 = vmax.f32 %v1268, 0.0
      %v1341 = vmax.f32 %v1270, 0.0
      %v1342 = vmax.f32 %v1272, 0.0
      %v1343 = vmax.f32 %v1274, 0.0
      %v1344 = vmax.f32 %v1278, 0.0
      %v1345 = vmax.f32 %v1280, 0.0
      %v1346 = vmax.f32 %v1282, 0.0
      %v1347 = vmax.f32 %v1284, 0.0
      %v1348 = vmax.f32 %v1288, 0.0
      %v1349 = vmax.f32 %v1290, 0.0
      %v1350 = vmax.f32 %v1292, 0.0
      %v1351 = vmax.f32 %v1294, 0.0
      %v1352 = vmax.f32 %v1298, 0.0
      %v1353 = vmax.f32 %v1300, 0.0
      %v1354 = vmax.f32 %v1302, 0.0
      %v1355 = vmax.f32 %v1304, 0.0
      %v1356 = vmax.f32 %v1308, 0.0
      %v1357 = vmax.f32 %v1310, 0.0
      %v1358 = vmax.f32 %v1312, 0.0
      %v1359 = vmax.f32 %v1314, 0.0
      %v1360 = vmax.f32 %v1318, 0.0
      %v1361 = vmax.f32 %v1320, 0.0
      %v1362 = vmax.f32 %v1322, 0.0
      %v1363 = vmax.f32 %v1324, 0.0
      %v1364 = vmax.f32 %v1328, 0.0
      %v1365 = vmax.f32 %v1330, 0.0
      %v1366 = vmax.f32 %v1332, 0.0
      %v1367 = vmax.f32 %v1334, 0.0
      %v1368 = vpack.c.bf16 %v1338, %v1336
      %v1369 = vpack.c.bf16 %v1339, %v1337
      %v1370 = vpack.c.bf16 %v1342, %v1340
      %v1371 = vpack.c.bf16 %v1343, %v1341
      %v1372 = vpack.c.bf16 %v1346, %v1344
      %v1373 = vpack.c.bf16 %v1347, %v1345
      %v1374 = vpack.c.bf16 %v1350, %v1348
      %v1375 = vpack.c.bf16 %v1351, %v1349
      %v1376 = vpack.c.bf16 %v1354, %v1352
      %v1377 = vpack.c.bf16 %v1355, %v1353
      %v1378 = vpack.c.bf16 %v1358, %v1356
      %v1379 = vpack.c.bf16 %v1359, %v1357
      %v1380 = vpack.c.bf16 %v1362, %v1360
      %v1381 = vpack.c.bf16 %v1363, %v1361
      %v1382 = vpack.c.bf16 %v1366, %v1364
      %v1383 = vpack.c.bf16 %v1367, %v1365
      %v1384 = vld [vmem:[%s7] sm:$0xf]
      %v1385 = vld [vmem:[%s7 + $0x4] sm:$0xf]
      %v1386 = vld [vmem:[%s7 + $0x8] sm:$0xf]
      %v1387 = vld [vmem:[%s7 + $0xc] sm:$0xf]
      %v1388 = vld [vmem:[%s7 + $0x10] sm:$0xf]
      %v1389 = vld [vmem:[%s7 + $0x14] sm:$0xf]
      %v1390 = vld [vmem:[%s7 + $0x18] sm:$0xf]
      %v1391 = vld [vmem:[%s7 + $0x1c] sm:$0xf]
      %v1392 = vld [vmem:[%s8] sm:$0x1]
      %v1394 = vlaneseq
      %v1395 = vshrl.u32 %v1394, 7
      %v1396 = vsub.s32 0, %v1395
      %v1397 = vrot.slane %v1392, %v1396
      %v1407 = vunpack.c.l.b16 %v1384
      %v1408 = vunpack.c.l.b16 %v1385
      %v1409 = vunpack.c.l.b16 %v1386
      %v1410 = vunpack.c.l.b16 %v1387
      %v1411 = vunpack.c.l.b16 %v1388
      %v1412 = vunpack.c.l.b16 %v1389
      %v1413 = vunpack.c.l.b16 %v1390
      %v1414 = vunpack.c.l.b16 %v1391
      %v1415 = vpack.c.b16 %v1408, %v1407
      %v1416 = vpack.c.b16 %v1410, %v1409
      %v1417 = vpack.c.b16 %v1412, %v1411
      %v1418 = vpack.c.b16 %v1414, %v1413
      %v1424 = vsel %vm873, %v1011, 0
      %v1427 = vsel %vm873, %v1012, 0
      %v1430 = vsel %vm873, %v1013, 0
      %v1433 = vsel %vm873, %v1014, 0
      %v1436 = vsel %vm873, %v1015, 0
      %v1439 = vsel %vm873, %v1016, 0
      %v1442 = vsel %vm873, %v1017, 0
      %v1445 = vsel %vm873, %v1018, 0
      %1447 = vmatprep.subr.bf16.mxu0 0
      %1448 = vmatpush1.bf16.msra.mxu0 %v1415
      %1449 = vmatprep.subr.bf16.mxu0 0
      %1450 = vmatpush1.bf16.msra.mxu0 %v1416
      %1451 = vmatprep.subr.bf16.mxu0 0
      %1452 = vmatpush1.bf16.msra.mxu0 %v1417
      %1453 = vmatprep.subr.bf16.mxu0 0
      %1454 = vmatpush1.bf16.msra.mxu0 %v1418
      %1455 = vmatprep.subr.bf16.mxu0 0
      %1456 = vmatpush1.bf16.msra.mxu0 0
      %1457 = vmatprep.subr.bf16.mxu0 0
      %1458 = vmatpush1.bf16.msra.mxu0 0
      %1459 = vmatprep.subr.bf16.mxu0 0
      %1460 = vmatpush1.bf16.msra.mxu0 0
      %1461 = vmatprep.subr.bf16.mxu0 0
      %1462 = vmatpush1.bf16.msra.mxu0 0
      %1463 = vmatprep.subr.bf16.mxu0 0
      %1464 = vmatpush1.bf16.msra.mxu0 0
      %1465 = vmatprep.subr.bf16.mxu0 0
      %1466 = vmatpush1.bf16.msra.mxu0 0
      %1467 = vmatprep.subr.bf16.mxu0 0
      %1468 = vmatpush1.bf16.msra.mxu0 0
      %1469 = vmatprep.subr.bf16.mxu0 0
      %1470 = vmatpush1.bf16.msra.mxu0 0
      %1471 = vmatprep.subr.bf16.mxu0 0
      %1472 = vmatpush1.bf16.msra.mxu0 0
      %1473 = vmatprep.subr.bf16.mxu0 0
      %1474 = vmatpush1.bf16.msra.mxu0 0
      %1475 = vmatprep.subr.bf16.mxu0 0
      %1476 = vmatpush1.bf16.msra.mxu0 0
      %1477 = vmatprep.subr.bf16.mxu0 0
      %1478 = vmatpush1.bf16.msra.mxu0 0
      %1479 = vmatprep.mubr.bf16.mxu0 0
      %1480 = vmatmul.mubr.bf16.gmra.mrb[0].mxu0 %v1424
      %v1481 = vpop.f32.mrb[0].mxu0
      %v1482 = vadd.f32 %v1397, %v1481
      %v1483 = vpop.f32.mrb[0].mxu0
      %v1484 = vpop.f32.mrb[0].mxu0
      %v1485 = vadd.f32 %v1397, %v1484
      %v1486 = vpop.f32.mrb[0].mxu0
      %1487 = vmatprep.mubr.bf16.mxu0 0
      %1488 = vmatmul.mubr.bf16.gmra.mrb[0].mxu0 %v1427
      %v1489 = vpop.f32.mrb[0].mxu0
      %v1490 = vadd.f32 %v1397, %v1489
      %v1491 = vpop.f32.mrb[0].mxu0
      %v1492 = vpop.f32.mrb[0].mxu0
      %v1493 = vadd.f32 %v1397, %v1492
      %v1494 = vpop.f32.mrb[0].mxu0
      %1495 = vmatprep.mubr.bf16.mxu0 0
      %1496 = vmatmul.mubr.bf16.gmra.mrb[0].mxu0 %v1430
      %v1497 = vpop.f32.mrb[0].mxu0
      %v1498 = vadd.f32 %v1397, %v1497
      %v1499 = vpop.f32.mrb[0].mxu0
      %v1500 = vpop.f32.mrb[0].mxu0
      %v1501 = vadd.f32 %v1397, %v1500
      %v1502 = vpop.f32.mrb[0].mxu0
      %1503 = vmatprep.mubr.bf16.mxu0 0
      %1504 = vmatmul.mubr.bf16.gmra.mrb[0].mxu0 %v1433
      %v1505 = vpop.f32.mrb[0].mxu0
      %v1506 = vadd.f32 %v1397, %v1505
      %v1507 = vpop.f32.mrb[0].mxu0
      %v1508 = vpop.f32.mrb[0].mxu0
      %v1509 = vadd.f32 %v1397, %v1508
      %v1510 = vpop.f32.mrb[0].mxu0
      %1511 = vmatprep.mubr.bf16.mxu0 0
      %1512 = vmatmul.mubr.bf16.gmra.mrb[0].mxu0 %v1436
      %v1513 = vpop.f32.mrb[0].mxu0
      %v1514 = vadd.f32 %v1397, %v1513
      %v1515 = vpop.f32.mrb[0].mxu0
      %v1516 = vpop.f32.mrb[0].mxu0
      %v1517 = vadd.f32 %v1397, %v1516
      %v1518 = vpop.f32.mrb[0].mxu0
      %1519 = vmatprep.mubr.bf16.mxu0 0
      %1520 = vmatmul.mubr.bf16.gmra.mrb[0].mxu0 %v1439
      %v1521 = vpop.f32.mrb[0].mxu0
      %v1522 = vadd.f32 %v1397, %v1521
      %v1523 = vpop.f32.mrb[0].mxu0
      %v1524 = vpop.f32.mrb[0].mxu0
      %v1525 = vadd.f32 %v1397, %v1524
      %v1526 = vpop.f32.mrb[0].mxu0
      %1527 = vmatprep.mubr.bf16.mxu0 0
      %1528 = vmatmul.mubr.bf16.gmra.mrb[0].mxu0 %v1442
      %v1529 = vpop.f32.mrb[0].mxu0
      %v1530 = vadd.f32 %v1397, %v1529
      %v1531 = vpop.f32.mrb[0].mxu0
      %v1532 = vpop.f32.mrb[0].mxu0
      %v1533 = vadd.f32 %v1397, %v1532
      %v1534 = vpop.f32.mrb[0].mxu0
      %1535 = vmatprep.mubr.bf16.mxu0 0
      %1536 = vmatmul.mubr.bf16.gmra.mrb[0].mxu0 %v1445
      %v1537 = vpop.f32.mrb[0].mxu0
      %v1538 = vadd.f32 %v1397, %v1537
      %v1539 = vpop.f32.mrb[0].mxu0
      %v1540 = vpop.f32.mrb[0].mxu0
      %v1541 = vadd.f32 %v1397, %v1540
      %v1542 = vpop.f32.mrb[0].mxu0
      %1543 = vdwg.mxu0
      %v1544 = vtanh.pop %v1482
      %v1545 = vtanh.pop %v1485
      %v1546 = vtanh.pop %v1490
      %v1547 = vtanh.pop %v1493
      %v1548 = vtanh.pop %v1498
      %v1549 = vtanh.pop %v1501
      %v1550 = vtanh.pop %v1506
      %v1551 = vtanh.pop %v1509
      %v1552 = vtanh.pop %v1514
      %v1553 = vtanh.pop %v1517
      %v1554 = vtanh.pop %v1522
      %v1555 = vtanh.pop %v1525
      %v1556 = vtanh.pop %v1530
      %v1557 = vtanh.pop %v1533
      %v1558 = vtanh.pop %v1538
      %v1559 = vtanh.pop %v1541
      %vm1560 = vcmask 64512
      %1561 = vst.msk [vmem:[%s425] sm:$0xff] %vm1560, %v1544
      %1562 = vst.msk [vmem:[%s425 + $0x8] sm:$0xff] %vm1560, %v1545
      %1563 = vst.msk [vmem:[%s425 + $0x10] sm:$0xff] %vm1560, %v1546
      %1564 = vst.msk [vmem:[%s425 + $0x18] sm:$0xff] %vm1560, %v1547
      %1565 = vst.msk [vmem:[%s425 + $0x20] sm:$0xff] %vm1560, %v1548
      %1566 = vst.msk [vmem:[%s425 + $0x28] sm:$0xff] %vm1560, %v1549
      %1567 = vst.msk [vmem:[%s425 + $0x30] sm:$0xff] %vm1560, %v1550
      %1568 = vst.msk [vmem:[%s425 + $0x38] sm:$0xff] %vm1560, %v1551
      %1569 = vst.msk [vmem:[%s425 + $0x40] sm:$0xff] %vm1560, %v1552
      %1570 = vst.msk [vmem:[%s425 + $0x48] sm:$0xff] %vm1560, %v1553
      %1571 = vst.msk [vmem:[%s425 + $0x50] sm:$0xff] %vm1560, %v1554
      %1572 = vst.msk [vmem:[%s425 + $0x58] sm:$0xff] %vm1560, %v1555
      %1573 = vst.msk [vmem:[%s425 + $0x60] sm:$0xff] %vm1560, %v1556
      %1574 = vst.msk [vmem:[%s425 + $0x68] sm:$0xff] %vm1560, %v1557
      %1575 = vst.msk [vmem:[%s425 + $0x70] sm:$0xff] %vm1560, %v1558
      %1576 = vst.msk [vmem:[%s425 + $0x78] sm:$0xff] %vm1560, %v1559
      %v1577 = vld [vmem:[%s9] sm:$0xf]
      %v1578 = vld [vmem:[%s9 + $0x4] sm:$0xf]
      %v1579 = vld [vmem:[%s9 + $0x8] sm:$0xf]
      %v1580 = vld [vmem:[%s9 + $0xc] sm:$0xf]
      %v1581 = vld [vmem:[%s9 + $0x10] sm:$0xf]
      %v1582 = vld [vmem:[%s9 + $0x14] sm:$0xf]
      %v1583 = vld [vmem:[%s9 + $0x18] sm:$0xf]
      %v1584 = vld [vmem:[%s9 + $0x1c] sm:$0xf]
      %v1585 = vld [vmem:[%s9 + $0x20] sm:$0xf]
      %v1586 = vld [vmem:[%s9 + $0x24] sm:$0xf]
      %v1587 = vld [vmem:[%s9 + $0x28] sm:$0xf]
      %v1588 = vld [vmem:[%s9 + $0x2c] sm:$0xf]
      %v1589 = vld [vmem:[%s9 + $0x30] sm:$0xf]
      %v1590 = vld [vmem:[%s9 + $0x34] sm:$0xf]
      %v1591 = vld [vmem:[%s9 + $0x38] sm:$0xf]
      %v1592 = vld [vmem:[%s9 + $0x3c] sm:$0xf]
      %v1593 = vld [vmem:[%s9 + $0x40] sm:$0xf]
      %v1594 = vld [vmem:[%s9 + $0x44] sm:$0xf]
      %v1595 = vld [vmem:[%s9 + $0x48] sm:$0xf]
      %v1596 = vld [vmem:[%s9 + $0x4c] sm:$0xf]
      %v1597 = vld [vmem:[%s9 + $0x50] sm:$0xf]
      %v1598 = vld [vmem:[%s9 + $0x54] sm:$0xf]
      %v1599 = vld [vmem:[%s9 + $0x58] sm:$0xf]
      %v1600 = vld [vmem:[%s9 + $0x5c] sm:$0xf]
      %v1601 = vld [vmem:[%s9 + $0x60] sm:$0xf]
      %v1602 = vld [vmem:[%s9 + $0x64] sm:$0xf]
      %v1603 = vld [vmem:[%s9 + $0x68] sm:$0xf]
      %v1604 = vld [vmem:[%s9 + $0x6c] sm:$0xf]
      %v1605 = vld [vmem:[%s9 + $0x70] sm:$0xf]
      %v1606 = vld [vmem:[%s9 + $0x74] sm:$0xf]
      %v1607 = vld [vmem:[%s9 + $0x78] sm:$0xf]
      %v1608 = vld [vmem:[%s9 + $0x7c] sm:$0xf]
      %v1609 = vld [vmem:[#allocation2] sm:$0x1]
      %v1611 = vlaneseq
      %v1612 = vshrl.u32 %v1611, 7
      %v1613 = vsub.s32 0, %v1612
      %v1614 = vrot.slane %v1609, %v1613
      %v1648 = vunpack.c.l.b16 %v1577
      %v1649 = vunpack.c.l.b16 %v1578
      %v1650 = vunpack.c.l.b16 %v1579
      %v1651 = vunpack.c.l.b16 %v1580
      %v1652 = vunpack.c.l.b16 %v1581
      %v1653 = vunpack.c.l.b16 %v1582
      %v1654 = vunpack.c.l.b16 %v1583
      %v1655 = vunpack.c.l.b16 %v1584
      %v1656 = vunpack.c.l.b16 %v1585
      %v1657 = vunpack.c.l.b16 %v1586
      %v1658 = vunpack.c.l.b16 %v1587
      %v1659 = vunpack.c.l.b16 %v1588
      %v1660 = vunpack.c.l.b16 %v1589
      %v1661 = vunpack.c.l.b16 %v1590
      %v1662 = vunpack.c.l.b16 %v1591
      %v1663 = vunpack.c.l.b16 %v1592
      %v1664 = vunpack.c.l.b16 %v1593
      %v1665 = vunpack.c.l.b16 %v1594
      %v1666 = vunpack.c.l.b16 %v1595
      %v1667 = vunpack.c.l.b16 %v1596
      %v1668 = vunpack.c.l.b16 %v1597
      %v1669 = vunpack.c.l.b16 %v1598
      %v1670 = vunpack.c.l.b16 %v1599
      %v1671 = vunpack.c.l.b16 %v1600
      %v1672 = vunpack.c.l.b16 %v1601
      %v1673 = vunpack.c.l.b16 %v1602
      %v1674 = vunpack.c.l.b16 %v1603
      %v1675 = vunpack.c.l.b16 %v1604
      %v1676 = vunpack.c.l.b16 %v1605
      %v1677 = vunpack.c.l.b16 %v1606
      %v1678 = vunpack.c.l.b16 %v1607
      %v1679 = vunpack.c.l.b16 %v1608
      %v1680 = vpack.c.b16 %v1649, %v1648
      %v1681 = vpack.c.b16 %v1651, %v1650
      %v1682 = vpack.c.b16 %v1653, %v1652
      %v1683 = vpack.c.b16 %v1655, %v1654
      %v1684 = vpack.c.b16 %v1657, %v1656
      %v1685 = vpack.c.b16 %v1659, %v1658
      %v1686 = vpack.c.b16 %v1661, %v1660
      %v1687 = vpack.c.b16 %v1663, %v1662
      %v1688 = vpack.c.b16 %v1665, %v1664
      %v1689 = vpack.c.b16 %v1667, %v1666
      %v1690 = vpack.c.b16 %v1669, %v1668
      %v1691 = vpack.c.b16 %v1671, %v1670
      %v1692 = vpack.c.b16 %v1673, %v1672
      %v1693 = vpack.c.b16 %v1675, %v1674
      %v1694 = vpack.c.b16 %v1677, %v1676
      %v1695 = vpack.c.b16 %v1679, %v1678
      %1712 = vmatprep.subr.bf16.mxu0 0
      %1713 = vmatpush1.bf16.msra.mxu0 %v1680
      %1714 = vmatprep.subr.bf16.mxu0 0
      %1715 = vmatpush1.bf16.msra.mxu0 %v1681
      %1716 = vmatprep.subr.bf16.mxu0 0
      %1717 = vmatpush1.bf16.msra.mxu0 %v1682
      %1718 = vmatprep.subr.bf16.mxu0 0
      %1719 = vmatpush1.bf16.msra.mxu0 %v1683
      %1720 = vmatprep.subr.bf16.mxu0 0
      %1721 = vmatpush1.bf16.msra.mxu0 %v1684
      %1722 = vmatprep.subr.bf16.mxu0 0
      %1723 = vmatpush1.bf16.msra.mxu0 %v1685
      %1724 = vmatprep.subr.bf16.mxu0 0
      %1725 = vmatpush1.bf16.msra.mxu0 %v1686
      %1726 = vmatprep.subr.bf16.mxu0 0
      %1727 = vmatpush1.bf16.msra.mxu0 %v1687
      %1728 = vmatprep.subr.bf16.mxu0 0
      %1729 = vmatpush1.bf16.msra.mxu0 %v1688
      %1730 = vmatprep.subr.bf16.mxu0 0
      %1731 = vmatpush1.bf16.msra.mxu0 %v1689
      %1732 = vmatprep.subr.bf16.mxu0 0
      %1733 = vmatpush1.bf16.msra.mxu0 %v1690
      %1734 = vmatprep.subr.bf16.mxu0 0
      %1735 = vmatpush1.bf16.msra.mxu0 %v1691
      %1736 = vmatprep.subr.bf16.mxu0 0
      %1737 = vmatpush1.bf16.msra.mxu0 %v1692
      %1738 = vmatprep.subr.bf16.mxu0 0
      %1739 = vmatpush1.bf16.msra.mxu0 %v1693
      %1740 = vmatprep.subr.bf16.mxu0 0
      %1741 = vmatpush1.bf16.msra.mxu0 %v1694
      %1742 = vmatprep.subr.bf16.mxu0 0
      %1743 = vmatpush1.bf16.msra.mxu0 %v1695
      %1744 = vmatprep.mubr.bf16.mxu0 %v1369
      %1745 = vmatmul.mubr.bf16.gmra.mrb[0].mxu0 %v1368
      %v1746 = vpop.f32.mrb[0].mxu0
      %v1747 = vadd.f32 %v1614, %v1746
      %v1748 = vpop.f32.mrb[0].mxu0
      %v1749 = vpop.f32.mrb[0].mxu0
      %v1750 = vadd.f32 %v1614, %v1749
      %v1751 = vpop.f32.mrb[0].mxu0
      %1752 = vmatprep.mubr.bf16.mxu0 %v1371
      %1753 = vmatmul.mubr.bf16.gmra.mrb[0].mxu0 %v1370
      %v1754 = vpop.f32.mrb[0].mxu0
      %v1755 = vadd.f32 %v1614, %v1754
      %v1756 = vpop.f32.mrb[0].mxu0
      %v1757 = vpop.f32.mrb[0].mxu0
      %v1758 = vadd.f32 %v1614, %v1757
      %v1759 = vpop.f32.mrb[0].mxu0
      %1760 = vmatprep.mubr.bf16.mxu0 %v1373
      %1761 = vmatmul.mubr.bf16.gmra.mrb[0].mxu0 %v1372
      %v1762 = vpop.f32.mrb[0].mxu0
      %v1763 = vadd.f32 %v1614, %v1762
      %v1764 = vpop.f32.mrb[0].mxu0
      %v1765 = vpop.f32.mrb[0].mxu0
      %v1766 = vadd.f32 %v1614, %v1765
      %v1767 = vpop.f32.mrb[0].mxu0
      %1768 = vmatprep.mubr.bf16.mxu0 %v1375
      %1769 = vmatmul.mubr.bf16.gmra.mrb[0].mxu0 %v1374
      %v1770 = vpop.f32.mrb[0].mxu0
      %v1771 = vadd.f32 %v1614, %v1770
      %v1772 = vpop.f32.mrb[0].mxu0
      %v1773 = vpop.f32.mrb[0].mxu0
      %v1774 = vadd.f32 %v1614, %v1773
      %v1775 = vpop.f32.mrb[0].mxu0
      %1776 = vmatprep.mubr.bf16.mxu0 %v1377
      %1777 = vmatmul.mubr.bf16.gmra.mrb[0].mxu0 %v1376
      %v1778 = vpop.f32.mrb[0].mxu0
      %v1779 = vadd.f32 %v1614, %v1778
      %v1780 = vpop.f32.mrb[0].mxu0
      %v1781 = vpop.f32.mrb[0].mxu0
      %v1782 = vadd.f32 %v1614, %v1781
      %v1783 = vpop.f32.mrb[0].mxu0
      %1784 = vmatprep.mubr.bf16.mxu0 %v1379
      %1785 = vmatmul.mubr.bf16.gmra.mrb[0].mxu0 %v1378
      %v1786 = vpop.f32.mrb[0].mxu0
      %v1787 = vadd.f32 %v1614, %v1786
      %v1788 = vpop.f32.mrb[0].mxu0
      %v1789 = vpop.f32.mrb[0].mxu0
      %v1790 = vadd.f32 %v1614, %v1789
      %v1791 = vpop.f32.mrb[0].mxu0
      %1792 = vmatprep.mubr.bf16.mxu0 %v1381
      %1793 = vmatmul.mubr.bf16.gmra.mrb[0].mxu0 %v1380
      %v1794 = vpop.f32.mrb[0].mxu0
      %v1795 = vadd.f32 %v1614, %v1794
      %v1796 = vpop.f32.mrb[0].mxu0
      %v1797 = vpop.f32.mrb[0].mxu0
      %v1798 = vadd.f32 %v1614, %v1797
      %v1799 = vpop.f32.mrb[0].mxu0
      %1800 = vmatprep.mubr.bf16.mxu0 %v1383
      %1801 = vmatmul.mubr.bf16.gmra.mrb[0].mxu0 %v1382
      %v1802 = vpop.f32.mrb[0].mxu0
      %v1803 = vadd.f32 %v1614, %v1802
      %v1804 = vpop.f32.mrb[0].mxu0
      %v1805 = vpop.f32.mrb[0].mxu0
      %v1806 = vadd.f32 %v1614, %v1805
      %v1807 = vpop.f32.mrb[0].mxu0
      %1808 = vdwg.mxu0
      %vm1809 = vcmask 7168
      %1810 = vst.msk [vmem:[%s431] sm:$0xff] %vm1809, %v1747
      %1811 = vst.msk [vmem:[%s431 + $0x8] sm:$0xff] %vm1809, %v1750
      %1812 = vst.msk [vmem:[%s431 + $0x10] sm:$0xff] %vm1809, %v1755
      %1813 = vst.msk [vmem:[%s431 + $0x18] sm:$0xff] %vm1809, %v1758
      %1814 = vst.msk [vmem:[%s431 + $0x20] sm:$0xff] %vm1809, %v1763
      %1815 = vst.msk [vmem:[%s431 + $0x28] sm:$0xff] %vm1809, %v1766
      %1816 = vst.msk [vmem:[%s431 + $0x30] sm:$0xff] %vm1809, %v1771
      %1817 = vst.msk [vmem:[%s431 + $0x38] sm:$0xff] %vm1809, %v1774
      %1818 = vst.msk [vmem:[%s431 + $0x40] sm:$0xff] %vm1809, %v1779
      %1819 = vst.msk [vmem:[%s431 + $0x48] sm:$0xff] %vm1809, %v1782
      %1820 = vst.msk [vmem:[%s431 + $0x50] sm:$0xff] %vm1809, %v1787
      %1821 = vst.msk [vmem:[%s431 + $0x58] sm:$0xff] %vm1809, %v1790
      %1822 = vst.msk [vmem:[%s431 + $0x60] sm:$0xff] %vm1809, %v1795
      %1823 = vst.msk [vmem:[%s431 + $0x68] sm:$0xff] %vm1809, %v1798
      %1824 = vst.msk [vmem:[%s431 + $0x70] sm:$0xff] %vm1809, %v1803
      %1825 = vst.msk [vmem:[%s431 + $0x78] sm:$0xff] %vm1809, %v1806
      %s1826 = smul.u32 16, %s26
      %p1827 = scmp.lt.s32.totalorder %s1826, 31
      %s1828 = scalar_select %p1827, %s1826, 31
      %s1829 = smul.addr %s1828, 8
      %s1830 = scalar_lea.vmem %s11, %s1829
      %s1831 = smul.u32 16, %s26
      %p1832 = scmp.lt.s32.totalorder %s1831, 31
      %s1833 = scalar_select %p1832, %s1831, 31
      %s1834 = smul.addr %s1833, 8
      %s1835 = scalar_lea.vmem %s12, %s1834
      // Predicated region
      $region65: #{tpu_custom_call.1} parent=63 // pred_check
        %p1836 = pneg %p280
      $region66: #{tpu_custom_call.1} parent=63 // pred_check_branch
        %1838 = sbr.rel (%p1836) target = $region68
      $region67: #{tpu_custom_call.1} parent=63 // pred_region
        %s1839 = smul.u32 16, %s26
      $region68: #{tpu_custom_call.1} parent=63 // pred_fallthru
        _
      // Predicated region
      $region69: #{tpu_custom_call.1} parent=63 // pred_check
        %p1840 = pneg %p306
      $region70: #{tpu_custom_call.1} parent=63 // pred_check_branch
        %1842 = sbr.rel (%p1840) target = $region72
      $region71: #{tpu_custom_call.1} parent=63 // pred_region
        %s1843 = smul.u32 16, %s26
      $region72: #{tpu_custom_call.1} parent=63 // pred_fallthru
        _
    $region64: #{tpu_custom_call.1} parent=5 // pred_fallthru
      _
    %p1844 = scmp.le.s32.totalorder 2, %s21
    // Predicated region
    $region73: #{tpu_custom_call.1} parent=5 // pred_check
      %p1845 = pneg %p1844
    $region74: #{tpu_custom_call.1} parent=5 // pred_check_branch
      %1847 = sbr.rel (%p1845) target = $region76
    $region75: #{tpu_custom_call.1} parent=5 // pred_region
      %s1848 = ssub.s32 %s21, 2
      // Predicated region
      $region77: #{tpu_custom_call.1} parent=75 // pred_check
        %p1849 = pneg %p286
      $region78: #{tpu_custom_call.1} parent=75 // pred_check_branch
        %1851 = sbr.rel (%p1849) target = $region80
      $region79: #{tpu_custom_call.1} parent=75 // pred_region
        %s1852 = smul.u32 16, %s27
        %p1853 = scmp.lt.s32.totalorder %s1852, 31
        %s1854 = scalar_select %p1853, %s1852, 31
        %s1855 = smul.addr %s1854, 8
        %s1856 = scalar_lea.vmem %s11, %s1855
      $region80: #{tpu_custom_call.1} parent=75 // pred_fallthru
        _
      // Predicated region
      $region81: #{tpu_custom_call.1} parent=75 // pred_check
        %p1857 = pneg %p312
      $region82: #{tpu_custom_call.1} parent=75 // pred_check_branch
        %1859 = sbr.rel (%p1857) target = $region84
      $region83: #{tpu_custom_call.1} parent=75 // pred_region
        %s1860 = smul.u32 16, %s27
        %p1861 = scmp.lt.s32.totalorder %s1860, 31
        %s1862 = scalar_select %p1861, %s1860, 31
        %s1863 = smul.addr %s1862, 8
        %s1864 = scalar_lea.vmem %s12, %s1863
      $region84: #{tpu_custom_call.1} parent=75 // pred_fallthru
        _
    $region76: #{tpu_custom_call.1} parent=5 // pred_fallthru
      _
  $region6: #{tpu_custom_call.1} parent=0 // loop_footer
    %s25 = sadd.s32 1, %s21
  $region7: #{tpu_custom_call.1} parent=0 // loop_footer_branch
    %20 = sbr.rel target = $region3
  $region8: #{tpu_custom_call.1} parent=0 // loop_exit
    _

</llo_original>
